<compile_context>
chip_gen: v5e
topology: v5e:2x2
jax: 0.10.0
libtpu: 0.0.40
codegen_flags: <defaults>
</compile_context>

<pallas_src>
import jax
import jax.numpy as jnp
from jax.experimental import pallas as pl
from jax.experimental.pallas import tpu as pltpu


_AD_PERM = (3, 0, 1, 6, 4, 2, 7, 8, 5)


def _round_up(a: int, m: int) -> int:
    return (a + m - 1) // m * m


def _pick_tile_h(H, Wp, cin_p, cp, d, in_isz, out_isz, target=16 * 1024 * 1024):
    """Largest output-row tile whose (double-buffered) VMEM footprint fits target."""
    th = min(H, 512)
    while True:
        hin = th + 2 * d + 1
        need = (2 * hin * Wp * max(cin_p, 128) * in_isz      # input blocks (lane padded)
                + 2 * th * Wp * cp * out_isz                 # output blocks
                + th * Wp * cp * 4)                          # f32 accumulator
        if need <= target or th <= 8:
            return max(1, th)
        th = max(8, (th + 1) // 2)


def _make_kernel(TH, Hin, Wp, d, cin, cp):
    """One grid step = TH output rows of one (batch, group) image."""
    rows_out = TH * Wp
    rows_view = (TH + 2 * d) * Wp

    def kernel(x_ref, w_ref, b_ref, o_ref):
        # x_ref: (1, Hin, Wp, cin)  zero-padded input tile (incl. halo rows)
        # w_ref: (1, 9, cin, cp)    AD-transformed weights, tap-major, cout padded
        # b_ref: (1, 1, cp)         f32 bias row (zeros if no bias / padded)
        # o_ref: (1, TH, Wp, cp)    width- and cout-padded output tile
        xf = x_ref[0].reshape(Hin * Wp, cin)          # layout-free: Wp % 8 == 0
        # One column-shifted view per kw; the per-kh row slices below start at
        # multiples of Wp (8-aligned), avoiding 9 misaligned relayout copies.
        views = [xf[kw * d:kw * d + rows_view, :] for kw in range(3)]
        # Accumulator starts from the broadcast bias (no separate bias pass).
        acc = jnp.broadcast_to(b_ref[0].astype(jnp.float32), (rows_out, cp))
        # TODO(synk): for very small cin, concatenate the 9 tap slices along K
        # into a single (rows, 9*cin) matmul to fill more MXU contraction depth.
        for kh in range(3):
            r0 = kh * d * Wp                          # multiple of 8
            for kw in range(3):
                xs = views[kw][r0:r0 + rows_out, :]
                acc = acc + jnp.dot(xs, w_ref[0, kh * 3 + kw],
                                    preferred_element_type=jnp.float32)
        o_ref[0] = acc.reshape(TH, Wp, cp).astype(o_ref.dtype)

    return kernel


def adconv2d(x, weight, bias=None, *, stride=1, padding=None, dilation=1,
             groups=1, compute_dtype=jnp.bfloat16):
    """Forward pass of ADConv2d. x: (N, Cin, H, W), weight: (Cout, Cin//g, 3, 3)."""
    assert dilation in (1, 2), "dilation for ad_conv should be 1 or 2"
    Cout, Cin_g, kh_, kw_ = weight.shape
    assert (kh_, kw_) == (3, 3), "kernel size for ad_conv should be 3x3"
    if padding is None:
        padding = dilation
    assert padding == dilation, "padding for ad_conv set wrong"
    N, Cin, H, W = x.shape
    assert Cin == Cin_g * groups and Cout % groups == 0

    G = groups
    cpg = Cout // G
    d = dilation
    out_dtype = x.dtype
    cdt = out_dtype if compute_dtype is None else compute_dtype
    in_isz = jnp.dtype(cdt).itemsize
    out_isz = jnp.dtype(out_dtype).itemsize

    # Lane/sublane-friendly channel padding (trimmed in the wrapper).
    Cp = _round_up(max(cpg, 128), 128)      # out channels -> lane-dense stores
    Cin_p = _round_up(Cin_g, 8)             # in channels  -> (8,128) weight tile

    # ---- weight re-parameterization: w - w[perm] over the 9 taps -------------
    w_flat = weight.reshape(Cout, Cin_g, 9)
    w_ad = w_flat - w_flat[:, :, jnp.array(_AD_PERM)]
    # (G, 9, Cin_g, cpg), tap index j = kh*3 + kw, then zero-pad channels.
    w_taps = jnp.transpose(w_ad.reshape(G, cpg, Cin_g, 9), (0, 3, 2, 1))
    w_taps = jnp.pad(w_taps, ((0, 0), (0, 0),
                              (0, Cin_p - Cin_g), (0, Cp - cpg))).astype(cdt)

    if bias is None:
        b_row = jnp.zeros((G, 1, Cp), jnp.float32)
    else:
        b_row = jnp.pad(bias.astype(jnp.float32).reshape(G, 1, cpg),
                        ((0, 0), (0, 0), (0, Cp - cpg)))

    # ---- input: NCHW -> grouped NHWC, zero-pad, H-tile with halo rows --------
    Wp = _round_up(W + 2 * d, 8)
    TH = _pick_tile_h(H, Wp, Cin_p, Cp, d, in_isz, out_isz)
    nT = -(-H // TH)                    # cdiv
    Hpad = nT * TH
    Hin = TH + 2 * d + 1                # +1 zero row keeps shifted views in range

    x_g = jnp.transpose(x.reshape(N, G, Cin_g, H, W), (0, 1, 3, 4, 2))
    x_g = x_g.reshape(N * G, H, W, Cin_g).astype(cdt)
    x_p = jnp.pad(x_g, ((0, 0),
                        (d, Hpad - H + d + 1),
                        (d, Wp - W - d),
                        (0, Cin_p - Cin_g)))
    if nT == 1:
        x_t = x_p[:, None]
    else:
        # TODO(synk): for very large images this materializes the halo'd tiles in
        # HBM (one extra input pass); a manual-DMA halo fetch (pl.ANY input) would
        # avoid the copy.
        x_t = jnp.stack([x_p[:, t * TH:t * TH + Hin] for t in range(nT)], axis=1)
    x_t = x_t.reshape(N * G * nT, Hin, Wp, Cin_p)

    kernel = _make_kernel(TH, Hin, Wp, d, Cin_p, Cp)

    # Advisory cost estimate + explicit VMEM budget for the chosen tiles.
    flops = 2 * (N * G * nT) * 9 * TH * Wp * Cin_p * Cp
    bytes_accessed = (x_t.size * in_isz + w_taps.size * in_isz + b_row.size * 4
                      + (N * G * nT) * TH * Wp * Cp * out_isz)
    need = (2 * Hin * Wp * max(Cin_p, 128) * in_isz
            + 2 * TH * Wp * Cp * out_isz
            + TH * Wp * Cp * 4
            + 2 * 9 * Cin_p * Cp * in_isz
            + (1 << 20))
    vmem_limit = int(min(max(2 * need, 32 * 1024 * 1024), 48 * 1024 * 1024))

    out = pl.pallas_call(
        kernel,
        out_shape=jax.ShapeDtypeStruct((N * G * nT, TH, Wp, Cp), out_dtype),
        grid=(N * G, nT),
        in_specs=[
            pl.BlockSpec((1, Hin, Wp, Cin_p), lambda i, t: (i * nT + t, 0, 0, 0)),
            pl.BlockSpec((1, 9, Cin_p, Cp), lambda i, t: (i % G, 0, 0, 0)),
            pl.BlockSpec((1, 1, Cp), lambda i, t: (i % G, 0, 0)),
        ],
        out_specs=pl.BlockSpec((1, TH, Wp, Cp), lambda i, t: (i * nT + t, 0, 0, 0)),
        compiler_params=pltpu.CompilerParams(
            dimension_semantics=("parallel", "parallel"),
            vmem_limit_bytes=vmem_limit),
        cost_estimate=pl.CostEstimate(flops=flops, transcendentals=0,
                                      bytes_accessed=bytes_accessed),
    )(x_t, w_taps, b_row)

    # ---- trim H/W/Cout padding, back to NCHW (single fused XLA pass) ---------
    y = out.reshape(N, G, Hpad, Wp, Cp)[:, :, :H, :W, :cpg]
    y = jnp.transpose(y, (0, 1, 4, 2, 3)).reshape(N, Cout, H, W)

    if stride != 1:
        # TODO(synk): fold stride into the kernel's row/column indexing instead of
        # computing the dense stride-1 output and subsampling.
        y = y[:, :, ::stride, ::stride]
    return y


def _reference(x, w, b, *, stride, dilation, groups):
    """Pure-XLA reference: same weight transform + conv (== F.conv2d semantics)."""
    cout, cin_g, _, _ = w.shape
    w_flat = w.reshape(cout, cin_g, 9)
    w_conv = (w_flat - w_flat[:, :, jnp.array(_AD_PERM)]).reshape(cout, cin_g, 3, 3)
    y = jax.lax.conv_general_dilated(
        x, w_conv, window_strides=(stride, stride),
        padding=((dilation, dilation), (dilation, dilation)),
        rhs_dilation=(dilation, dilation),
        dimension_numbers=("NCHW", "OIHW", "NCHW"),
        feature_group_count=groups,
        precision=jax.lax.Precision.HIGHEST)
    if b is not None:
        y = y + b.reshape(1, -1, 1, 1)
    return y


if __name__ == "__main__":
    key = jax.random.PRNGKey(0)
    kx, kw1, kw2, kb = jax.random.split(key, 4)

    N, Cin, H, W = 2, 4, 16, 16
    Cout = 4
    x = jax.random.normal(kx, (N, Cin, H, W), dtype=jnp.float32)

    # kaiming_uniform(a=sqrt(5))-style init, as in the PyTorch module.
    fan_in = Cin * 9
    bound = (1.0 / fan_in) ** 0.5
    weight = jax.random.uniform(kw1, (Cout, Cin, 3, 3), jnp.float32, -bound, bound)

    # Case 1: module defaults (groups=1, dilation=1, no bias, stride=1).
    y = adconv2d(x, weight, bias=None, stride=1, padding=1, dilation=1, groups=1)
    jax.block_until_ready(y)
    ref = _reference(x, weight, None, stride=1, dilation=1, groups=1)
    assert y.shape == ref.shape and y.dtype == ref.dtype
    err = float(jnp.max(jnp.abs(y - ref)))
    assert err < 2e-2, f"case1 max abs error {err}"

    # Case 2: dilation=2, groups=2, bias, stride=2 (exercises the general path).
    weight2 = jax.random.uniform(kw2, (Cout, Cin // 2, 3, 3), jnp.float32, -bound, bound)
    bias2 = jax.random.uniform(kb, (Cout,), jnp.float32, -bound, bound)
    y2 = adconv2d(x, weight2, bias=bias2, stride=2, padding=2, dilation=2, groups=2)
    jax.block_until_ready(y2)
    ref2 = _reference(x, weight2, bias2, stride=2, dilation=2, groups=2)
    assert y2.shape == ref2.shape
    err2 = float(jnp.max(jnp.abs(y2 - ref2)))
    assert err2 < 2e-2, f"case2 max abs error {err2}"

    print("KERNEL_OK")
</pallas_src>

<mosaic_0001>
module attributes {stable_mosaic.version = 11 : i64} {
  func.func @kernel(%arg0: i32, %arg1: i32, %arg2: memref<1x19x24x8xbf16, #tpu.memory_space<vmem>>, %arg3: memref<1x9x8x128xbf16, #tpu.memory_space<vmem>>, %arg4: memref<1x1x128xf32, #tpu.memory_space<vmem>>, %arg5: memref<1x16x24x128xf32, #tpu.memory_space<vmem>>) attributes {dimension_semantics = [#tpu.dimension_semantics<parallel>, #tpu.dimension_semantics<parallel>], iteration_bounds = array<i64: 2, 1>, scalar_prefetch = 0 : i64, scratch_operands = 0 : i64, tpu.core_type = #tpu.core_type<tc>, window_params = [{transform_indices = @transform_0, window_bounds = array<i64: 1, 19, 24, 8>}, {transform_indices = @transform_1, window_bounds = array<i64: 1, 9, 8, 128>}, {transform_indices = @transform_2, window_bounds = array<i64: 1, 1, 128>}, {transform_indices = @transform_3, window_bounds = array<i64: 1, 16, 24, 128>}]} {
    %c0 = arith.constant 0 : index
    %c0_0 = arith.constant 0 : index
    %c0_1 = arith.constant 0 : index
    %c0_2 = arith.constant 0 : index
    %0 = vector.load %arg2[%c0, %c0_0, %c0_1, %c0_2] : memref<1x19x24x8xbf16, #tpu.memory_space<vmem>>, vector<1x19x24x8xbf16>
    %1 = vector.shape_cast %0 : vector<1x19x24x8xbf16> to vector<19x24x8xbf16>
    %2 = vector.shape_cast %1 : vector<19x24x8xbf16> to vector<456x8xbf16>
    %3 = vector.extract_strided_slice %2 {offsets = [0, 0], sizes = [432, 8], strides = [1, 1]} : vector<456x8xbf16> to vector<432x8xbf16>
    %4 = vector.extract_strided_slice %2 {offsets = [1, 0], sizes = [432, 8], strides = [1, 1]} : vector<456x8xbf16> to vector<432x8xbf16>
    %5 = vector.extract_strided_slice %2 {offsets = [2, 0], sizes = [432, 8], strides = [1, 1]} : vector<456x8xbf16> to vector<432x8xbf16>
    %c0_3 = arith.constant 0 : index
    %c0_4 = arith.constant 0 : index
    %c0_5 = arith.constant 0 : index
    %6 = vector.load %arg4[%c0_3, %c0_4, %c0_5] : memref<1x1x128xf32, #tpu.memory_space<vmem>>, vector<1x1x128xf32>
    %7 = vector.shape_cast %6 : vector<1x1x128xf32> to vector<1x128xf32>
    %8 = vector.shape_cast %7 : vector<1x128xf32> to vector<1x128xf32>
    %9 = vector.broadcast %8 : vector<1x128xf32> to vector<384x128xf32>
    %10 = vector.extract_strided_slice %3 {offsets = [0, 0], sizes = [384, 8], strides = [1, 1]} : vector<432x8xbf16> to vector<384x8xbf16>
    %c0_6 = arith.constant 0 : index
    %c0_7 = arith.constant 0 : index
    %c0_8 = arith.constant 0 : index
    %c0_9 = arith.constant 0 : index
    %11 = vector.load %arg3[%c0_6, %c0_7, %c0_8, %c0_9] : memref<1x9x8x128xbf16, #tpu.memory_space<vmem>>, vector<1x1x8x128xbf16>
    %12 = vector.shape_cast %11 : vector<1x1x8x128xbf16> to vector<8x128xbf16>
    %cst = arith.constant dense<0.000000e+00> : vector<384x128xf32>
    %13 = tpu.matmul %10, %12, %cst {dimension_numbers = #tpu.dot_dimension_numbers<[1], [0], [0], [1], [0, 0, 1, 1], [], []>} : vector<384x8xbf16>, vector<8x128xbf16>, vector<384x128xf32> -> vector<384x128xf32>
    %14 = arith.addf %9, %13 : vector<384x128xf32>
    %15 = vector.extract_strided_slice %4 {offsets = [0, 0], sizes = [384, 8], strides = [1, 1]} : vector<432x8xbf16> to vector<384x8xbf16>
    %c0_10 = arith.constant 0 : index
    %c1 = arith.constant 1 : index
    %c0_11 = arith.constant 0 : index
    %c0_12 = arith.constant 0 : index
    %16 = vector.load %arg3[%c0_10, %c1, %c0_11, %c0_12] : memref<1x9x8x128xbf16, #tpu.memory_space<vmem>>, vector<1x1x8x128xbf16>
    %17 = vector.shape_cast %16 : vector<1x1x8x128xbf16> to vector<8x128xbf16>
    %cst_13 = arith.constant dense<0.000000e+00> : vector<384x128xf32>
    %18 = tpu.matmul %15, %17, %cst_13 {dimension_numbers = #tpu.dot_dimension_numbers<[1], [0], [0], [1], [0, 0, 1, 1], [], []>} : vector<384x8xbf16>, vector<8x128xbf16>, vector<384x128xf32> -> vector<384x128xf32>
    %19 = arith.addf %14, %18 : vector<384x128xf32>
    %20 = vector.extract_strided_slice %5 {offsets = [0, 0], sizes = [384, 8], strides = [1, 1]} : vector<432x8xbf16> to vector<384x8xbf16>
    %c0_14 = arith.constant 0 : index
    %c2 = arith.constant 2 : index
    %c0_15 = arith.constant 0 : index
    %c0_16 = arith.constant 0 : index
    %21 = vector.load %arg3[%c0_14, %c2, %c0_15, %c0_16] : memref<1x9x8x128xbf16, #tpu.memory_space<vmem>>, vector<1x1x8x128xbf16>
    %22 = vector.shape_cast %21 : vector<1x1x8x128xbf16> to vector<8x128xbf16>
    %cst_17 = arith.constant dense<0.000000e+00> : vector<384x128xf32>
    %23 = tpu.matmul %20, %22, %cst_17 {dimension_numbers = #tpu.dot_dimension_numbers<[1], [0], [0], [1], [0, 0, 1, 1], [], []>} : vector<384x8xbf16>, vector<8x128xbf16>, vector<384x128xf32> -> vector<384x128xf32>
    %24 = arith.addf %19, %23 : vector<384x128xf32>
    %25 = vector.extract_strided_slice %3 {offsets = [24, 0], sizes = [384, 8], strides = [1, 1]} : vector<432x8xbf16> to vector<384x8xbf16>
    %c0_18 = arith.constant 0 : index
    %c3 = arith.constant 3 : index
    %c0_19 = arith.constant 0 : index
    %c0_20 = arith.constant 0 : index
    %26 = vector.load %arg3[%c0_18, %c3, %c0_19, %c0_20] : memref<1x9x8x128xbf16, #tpu.memory_space<vmem>>, vector<1x1x8x128xbf16>
    %27 = vector.shape_cast %26 : vector<1x1x8x128xbf16> to vector<8x128xbf16>
    %cst_21 = arith.constant dense<0.000000e+00> : vector<384x128xf32>
    %28 = tpu.matmul %25, %27, %cst_21 {dimension_numbers = #tpu.dot_dimension_numbers<[1], [0], [0], [1], [0, 0, 1, 1], [], []>} : vector<384x8xbf16>, vector<8x128xbf16>, vector<384x128xf32> -> vector<384x128xf32>
    %29 = arith.addf %24, %28 : vector<384x128xf32>
    %30 = vector.extract_strided_slice %4 {offsets = [24, 0], sizes = [384, 8], strides = [1, 1]} : vector<432x8xbf16> to vector<384x8xbf16>
    %c0_22 = arith.constant 0 : index
    %c4 = arith.constant 4 : index
    %c0_23 = arith.constant 0 : index
    %c0_24 = arith.constant 0 : index
    %31 = vector.load %arg3[%c0_22, %c4, %c0_23, %c0_24] : memref<1x9x8x128xbf16, #tpu.memory_space<vmem>>, vector<1x1x8x128xbf16>
    %32 = vector.shape_cast %31 : vector<1x1x8x128xbf16> to vector<8x128xbf16>
    %cst_25 = arith.constant dense<0.000000e+00> : vector<384x128xf32>
    %33 = tpu.matmul %30, %32, %cst_25 {dimension_numbers = #tpu.dot_dimension_numbers<[1], [0], [0], [1], [0, 0, 1, 1], [], []>} : vector<384x8xbf16>, vector<8x128xbf16>, vector<384x128xf32> -> vector<384x128xf32>
    %34 = arith.addf %29, %33 : vector<384x128xf32>
    %35 = vector.extract_strided_slice %5 {offsets = [24, 0], sizes = [384, 8], strides = [1, 1]} : vector<432x8xbf16> to vector<384x8xbf16>
    %c0_26 = arith.constant 0 : index
    %c5 = arith.constant 5 : index
    %c0_27 = arith.constant 0 : index
    %c0_28 = arith.constant 0 : index
    %36 = vector.load %arg3[%c0_26, %c5, %c0_27, %c0_28] : memref<1x9x8x128xbf16, #tpu.memory_space<vmem>>, vector<1x1x8x128xbf16>
    %37 = vector.shape_cast %36 : vector<1x1x8x128xbf16> to vector<8x128xbf16>
    %cst_29 = arith.constant dense<0.000000e+00> : vector<384x128xf32>
    %38 = tpu.matmul %35, %37, %cst_29 {dimension_numbers = #tpu.dot_dimension_numbers<[1], [0], [0], [1], [0, 0, 1, 1], [], []>} : vector<384x8xbf16>, vector<8x128xbf16>, vector<384x128xf32> -> vector<384x128xf32>
    %39 = arith.addf %34, %38 : vector<384x128xf32>
    %40 = vector.extract_strided_slice %3 {offsets = [48, 0], sizes = [384, 8], strides = [1, 1]} : vector<432x8xbf16> to vector<384x8xbf16>
    %c0_30 = arith.constant 0 : index
    %c6 = arith.constant 6 : index
    %c0_31 = arith.constant 0 : index
    %c0_32 = arith.constant 0 : index
    %41 = vector.load %arg3[%c0_30, %c6, %c0_31, %c0_32] : memref<1x9x8x128xbf16, #tpu.memory_space<vmem>>, vector<1x1x8x128xbf16>
    %42 = vector.shape_cast %41 : vector<1x1x8x128xbf16> to vector<8x128xbf16>
    %cst_33 = arith.constant dense<0.000000e+00> : vector<384x128xf32>
    %43 = tpu.matmul %40, %42, %cst_33 {dimension_numbers = #tpu.dot_dimension_numbers<[1], [0], [0], [1], [0, 0, 1, 1], [], []>} : vector<384x8xbf16>, vector<8x128xbf16>, vector<384x128xf32> -> vector<384x128xf32>
    %44 = arith.addf %39, %43 : vector<384x128xf32>
    %45 = vector.extract_strided_slice %4 {offsets = [48, 0], sizes = [384, 8], strides = [1, 1]} : vector<432x8xbf16> to vector<384x8xbf16>
    %c0_34 = arith.constant 0 : index
    %c7 = arith.constant 7 : index
    %c0_35 = arith.constant 0 : index
    %c0_36 = arith.constant 0 : index
    %46 = vector.load %arg3[%c0_34, %c7, %c0_35, %c0_36] : memref<1x9x8x128xbf16, #tpu.memory_space<vmem>>, vector<1x1x8x128xbf16>
    %47 = vector.shape_cast %46 : vector<1x1x8x128xbf16> to vector<8x128xbf16>
    %cst_37 = arith.constant dense<0.000000e+00> : vector<384x128xf32>
    %48 = tpu.matmul %45, %47, %cst_37 {dimension_numbers = #tpu.dot_dimension_numbers<[1], [0], [0], [1], [0, 0, 1, 1], [], []>} : vector<384x8xbf16>, vector<8x128xbf16>, vector<384x128xf32> -> vector<384x128xf32>
    %49 = arith.addf %44, %48 : vector<384x128xf32>
    %50 = vector.extract_strided_slice %5 {offsets = [48, 0], sizes = [384, 8], strides = [1, 1]} : vector<432x8xbf16> to vector<384x8xbf16>
    %c0_38 = arith.constant 0 : index
    %c8 = arith.constant 8 : index
    %c0_39 = arith.constant 0 : index
    %c0_40 = arith.constant 0 : index
    %51 = vector.load %arg3[%c0_38, %c8, %c0_39, %c0_40] : memref<1x9x8x128xbf16, #tpu.memory_space<vmem>>, vector<1x1x8x128xbf16>
    %52 = vector.shape_cast %51 : vector<1x1x8x128xbf16> to vector<8x128xbf16>
    %cst_41 = arith.constant dense<0.000000e+00> : vector<384x128xf32>
    %53 = tpu.matmul %50, %52, %cst_41 {dimension_numbers = #tpu.dot_dimension_numbers<[1], [0], [0], [1], [0, 0, 1, 1], [], []>} : vector<384x8xbf16>, vector<8x128xbf16>, vector<384x128xf32> -> vector<384x128xf32>
    %54 = arith.addf %49, %53 : vector<384x128xf32>
    %55 = vector.shape_cast %54 : vector<384x128xf32> to vector<16x24x128xf32>
    %c0_42 = arith.constant 0 : index
    %c0_43 = arith.constant 0 : index
    %c0_44 = arith.constant 0 : index
    %c0_45 = arith.constant 0 : index
    %56 = vector.load %arg5[%c0_42, %c0_43, %c0_44, %c0_45] : memref<1x16x24x128xf32, #tpu.memory_space<vmem>>, vector<1x16x24x128xf32>
    %57 = vector.shape_cast %56 : vector<1x16x24x128xf32> to vector<16x24x128xf32>
    %58 = vector.shape_cast %55 : vector<16x24x128xf32> to vector<1x16x24x128xf32>
    tpu.vector_store %arg5[%c0_42, %c0_43, %c0_44, %c0_45], %58 {strides = array<i32>} : memref<1x16x24x128xf32, #tpu.memory_space<vmem>>, vector<1x16x24x128xf32>,
    return
  }
  func.func @transform_0(%arg0: i32, %arg1: i32) -> (i32, i32, i32, i32) {
    %c1_i32 = arith.constant 1 : i32
    %0 = arith.muli %arg0, %c1_i32 : i32
    %1 = arith.addi %0, %arg1 : i32
    %c0_i32 = arith.constant 0 : i32
    %c0_i32_0 = arith.constant 0 : i32
    %c0_i32_1 = arith.constant 0 : i32
    %c0_i32_2 = arith.constant 0 : i32
    return %1, %c0_i32, %c0_i32_0, %c0_i32_1 : i32, i32, i32, i32
  }
  func.func @transform_1(%arg0: i32, %arg1: i32) -> (i32, i32, i32, i32) {
    %c1_i32 = arith.constant 1 : i32
    %c0_i32 = arith.constant 0 : i32
    %0 = arith.cmpi eq, %c1_i32, %c0_i32 : i32
    %c1_i32_0 = arith.constant 1 : i32
    %1 = arith.select %0, %c1_i32_0, %c1_i32 : i32
    %2 = arith.remsi %arg0, %1 : i32
    %c0_i32_1 = arith.constant 0 : i32
    %3 = arith.cmpi ne, %2, %c0_i32_1 : i32
    %c0_i32_2 = arith.constant 0 : i32
    %4 = arith.cmpi slt, %2, %c0_i32_2 : i32
    %c0_i32_3 = arith.constant 0 : i32
    %5 = arith.cmpi slt, %1, %c0_i32_3 : i32
    %6 = arith.xori %4, %5 : i1
    %7 = arith.andi %6, %3 : i1
    %8 = arith.addi %2, %1 : i32
    %9 = arith.select %7, %8, %2 : i32
    %c0_i32_4 = arith.constant 0 : i32
    %c0_i32_5 = arith.constant 0 : i32
    %c0_i32_6 = arith.constant 0 : i32
    %c0_i32_7 = arith.constant 0 : i32
    return %9, %c0_i32_4, %c0_i32_5, %c0_i32_6 : i32, i32, i32, i32
  }
  func.func @transform_2(%arg0: i32, %arg1: i32) -> (i32, i32, i32) {
    %c1_i32 = arith.constant 1 : i32
    %c0_i32 = arith.constant 0 : i32
    %0 = arith.cmpi eq, %c1_i32, %c0_i32 : i32
    %c1_i32_0 = arith.constant 1 : i32
    %1 = arith.select %0, %c1_i32_0, %c1_i32 : i32
    %2 = arith.remsi %arg0, %1 : i32
    %c0_i32_1 = arith.constant 0 : i32
    %3 = arith.cmpi ne, %2, %c0_i32_1 : i32
    %c0_i32_2 = arith.constant 0 : i32
    %4 = arith.cmpi slt, %2, %c0_i32_2 : i32
    %c0_i32_3 = arith.constant 0 : i32
    %5 = arith.cmpi slt, %1, %c0_i32_3 : i32
    %6 = arith.xori %4, %5 : i1
    %7 = arith.andi %6, %3 : i1
    %8 = arith.addi %2, %1 : i32
    %9 = arith.select %7, %8, %2 : i32
    %c0_i32_4 = arith.constant 0 : i32
    %c0_i32_5 = arith.constant 0 : i32
    %c0_i32_6 = arith.constant 0 : i32
    return %9, %c0_i32_4, %c0_i32_5 : i32, i32, i32
  }
  func.func @transform_3(%arg0: i32, %arg1: i32) -> (i32, i32, i32, i32) {
    %c1_i32 = arith.constant 1 : i32
    %0 = arith.muli %arg0, %c1_i32 : i32
    %1 = arith.addi %0, %arg1 : i32
    %c0_i32 = arith.constant 0 : i32
    %c0_i32_0 = arith.constant 0 : i32
    %c0_i32_1 = arith.constant 0 : i32
    %c0_i32_2 = arith.constant 0 : i32
    return %1, %c0_i32, %c0_i32_0, %c0_i32_1 : i32, i32, i32, i32
  }
}

</mosaic_0001>

<llo_original>
// kernel: tpu_custom_call.1
$region0: #{tpu_custom_call.1}
  #allocation0 [shape = 'u32[]', space=smem, size = 0x4, offset = 0x4, fixed_abs, tag = 'smem constant byte address 0x4 - core index']
  #allocation1 [shape = 'u32[72,128]{1,0:T(1,128)}', space=vmem, size = 0x9000, scoped, tag = 'internal scratch']
  %s0 = inlined_call_operand.vmem [shape: bf16[2,19,24,8], index: 0, kind: input, shape index: {}]
  %s1 = inlined_call_operand.vmem [shape: bf16[1,9,8,128], index: 1, kind: input, shape index: {}]
  %s2 = inlined_call_operand.vmem [shape: f32[1,1,128], index: 2, kind: input, shape index: {}]
  %s3 = inlined_call_operand.hbm [shape: f32[2,16,24,128], index: 3, kind: output, shape index: {}]
  %s4 = sld [smem:[#allocation0]]
  $region45: #{tpu_custom_call.1} parent=0
    _
  %s6 = ssub.s32 1, %s4
  %s7 = scalar_select 0, %s6, %s4
  $region1: #{tpu_custom_call.1} parent=0
    #allocation2 [shape = 'u8[393216]{0}', space=vmem, size = 0x60000, scoped, tag = 'output window, operand 0']
    #allocation3 [shape = 's32[2]{0}', space=sflag, size = 0x8, scoped, tag = 'scoped memory for tpu_custom_call.1']
    %8 = vsyncpa [#allocation3], 0
    %s9 = scalar_lea.sflag [#allocation3], 1
    %10 = vsyncpa %s9, 0
    loop: start=0, step=1, limit=4
    $region2: #{tpu_custom_call.1} parent=1 // loop_pre_header
      _
    $region3: #{tpu_custom_call.1} parent=1 // loop_header
      %s12 = sphi 0, %s16
      %p13 = scmp.ge.s32.totalorder %s12, 4
      %s19 = sphi 0, %s31
      %s20 = sphi 0, %s27
      %s21 = sphi 0, %s19
      %s22 = sphi 0, %s20
      %s23 = sphi 0, %s21
      %s24 = sphi 0, %s22
      %s36 = sphi 0, %s38
      %s39 = sphi 0, %s36
      %s40 = sphi 0, %s39
      %s56 = sphi 0, %s40
      %s60 = sphi 0, %s60
      %s62 = sphi 0, %s60
      %s63 = sphi 0, %s62
      %s77 = sphi 0, %s63
      %s81 = sphi 0, %s81
      %s83 = sphi 0, %s81
      %s84 = sphi 0, %s83
      %s98 = sphi 0, %s84
      %s106 = sphi 0, %s108
      %s109 = sphi 0, %s106
      %s110 = sphi 0, %s109
      %s126 = sphi 0, %s110
    $region4: #{tpu_custom_call.1} parent=1 // loop_header_branch
      %15 = sbr.rel (%p13) target = $region8
    $region5: #{tpu_custom_call.1} parent=1 // loop_body
      %s17 = ssub.s32 %s12, 1
      %s18 = ssub.s32 %s12, 2
      %s25 = sadd.s32 1, %s20
      %p26 = scmp.ge.s32.totalorder %s25, 1
      %s27 = scalar_select %p26, 0, %s25
      %s28 = sadd.s32 1, %s19
      %s29 = scalar_select %p26, %s28, %s19
      %p30 = scmp.ge.s32.totalorder %s29, 2
      %s31 = scalar_select %p30, 0, %s29
      %s32 = sadd.s32 %s19, %s20
      %s33 = sadd.s32 %s31, %s27
      %s34 = ssub.s32 %s32, %s33
      %p35 = scmp.eq.s32.totalorder %s34, 0
      %s37 = sadd.s32 %s36, 1
      %s38 = scalar_select %p35, %s36, %s37
      %p41 = pneg %p35
      %p42 = scmp.eq.s32.totalorder %s12, 1
      %p43 = por %p41, %p42
      %p44 = scmp.ne.s32.totalorder %s36, %s39
      %p45 = scmp.eq.s32.totalorder %s12, 0
      %p46 = por %p44, %p45
      %p47 = scmp.ne.s32.totalorder %s36, %s39
      %p48 = scmp.eq.s32.totalorder %s17, 1
      %p49 = por %p47, %p48
      %p50 = scmp.ne.s32.totalorder %s39, %s40
      %p51 = scmp.eq.s32.totalorder %s17, 0
      %p52 = por %p50, %p51
      %p53 = scmp.ne.s32.totalorder %s39, %s40
      %p54 = scmp.eq.s32.totalorder %s18, 1
      %p55 = por %p53, %p54
      %p57 = scmp.ne.s32.totalorder %s40, %s56
      %p58 = scmp.eq.s32.totalorder %s18, 0
      %p59 = por %p57, %p58
      %s61 = sadd.s32 %s60, 1
      %p64 = scmp.eq.s32.totalorder %s12, 1
      %p65 = scmp.ne.s32.totalorder %s60, %s62
      %p66 = scmp.eq.s32.totalorder %s12, 0
      %p67 = por %p65, %p66
      %p68 = scmp.ne.s32.totalorder %s60, %s62
      %p69 = scmp.eq.s32.totalorder %s17, 1
      %p70 = por %p68, %p69
      %p71 = scmp.ne.s32.totalorder %s62, %s63
      %p72 = scmp.eq.s32.totalorder %s17, 0
      %p73 = por %p71, %p72
      %p74 = scmp.ne.s32.totalorder %s62, %s63
      %p75 = scmp.eq.s32.totalorder %s18, 1
      %p76 = por %p74, %p75
      %p78 = scmp.ne.s32.totalorder %s63, %s77
      %p79 = scmp.eq.s32.totalorder %s18, 0
      %p80 = por %p78, %p79
      %s82 = sadd.s32 %s81, 1
      %p85 = scmp.eq.s32.totalorder %s12, 1
      %p86 = scmp.ne.s32.totalorder %s81, %s83
      %p87 = scmp.eq.s32.totalorder %s12, 0
      %p88 = por %p86, %p87
      %p89 = scmp.ne.s32.totalorder %s81, %s83
      %p90 = scmp.eq.s32.totalorder %s17, 1
      %p91 = por %p89, %p90
      %p92 = scmp.ne.s32.totalorder %s83, %s84
      %p93 = scmp.eq.s32.totalorder %s17, 0
      %p94 = por %p92, %p93
      %p95 = scmp.ne.s32.totalorder %s83, %s84
      %p96 = scmp.eq.s32.totalorder %s18, 1
      %p97 = por %p95, %p96
      %p99 = scmp.ne.s32.totalorder %s84, %s98
      %p100 = scmp.eq.s32.totalorder %s18, 0
      %p101 = por %p99, %p100
      %s102 = sadd.s32 %s19, %s20
      %s103 = sadd.s32 %s31, %s27
      %s104 = ssub.s32 %s102, %s103
      %p105 = scmp.eq.s32.totalorder %s104, 0
      %s107 = sadd.s32 %s106, 1
      %s108 = scalar_select %p105, %s106, %s107
      %p111 = pneg %p105
      %p112 = scmp.eq.s32.totalorder %s12, 1
      %p113 = por %p111, %p112
      %p114 = scmp.ne.s32.totalorder %s106, %s109
      %p115 = scmp.eq.s32.totalorder %s12, 0
      %p116 = por %p114, %p115
      %p117 = scmp.ne.s32.totalorder %s106, %s109
      %p118 = scmp.eq.s32.totalorder %s17, 1
      %p119 = por %p117, %p118
      %p120 = scmp.ne.s32.totalorder %s109, %s110
      %p121 = scmp.eq.s32.totalorder %s17, 0
      %p122 = por %p120, %p121
      %p123 = scmp.ne.s32.totalorder %s109, %s110
      %p124 = scmp.eq.s32.totalorder %s18, 1
      %p125 = por %p123, %p124
      %p127 = scmp.ne.s32.totalorder %s110, %s126
      %p128 = scmp.eq.s32.totalorder %s18, 0
      %p129 = por %p127, %p128
      %p130 = scmp.le.s32.totalorder 1, %s12
      %p131 = scmp.lt.s32.totalorder %s12, 3
      %p132 = pnand %p130, %p131
      %p133 = pneg %p132
      // Predicated region
      $region9: #{tpu_custom_call.1} parent=5 // pred_check
        _
      $region10: #{tpu_custom_call.1} parent=5 // pred_check_branch
        %135 = sbr.rel (%p132) target = $region12
      $region11: #{tpu_custom_call.1} parent=5 // pred_region
        %s136 = ssub.s32 %s12, 1
        // Predicated region
        $region13: #{tpu_custom_call.1} parent=11 // pred_check
          %p137 = pneg %p73
        $region14: #{tpu_custom_call.1} parent=11 // pred_check_branch
          %139 = sbr.rel (%p137) target = $region16
        $region15: #{tpu_custom_call.1} parent=11 // pred_region
          _
        $region16: #{tpu_custom_call.1} parent=11 // pred_fallthru
          _
        // Predicated region
        $region17: #{tpu_custom_call.1} parent=11 // pred_check
          %p140 = pneg %p94
        $region18: #{tpu_custom_call.1} parent=11 // pred_check_branch
          %142 = sbr.rel (%p140) target = $region20
        $region19: #{tpu_custom_call.1} parent=11 // pred_region
          _
        $region20: #{tpu_custom_call.1} parent=11 // pred_fallthru
          _
      $region12: #{tpu_custom_call.1} parent=5 // pred_fallthru
        _
      %p143 = scmp.lt.s32.totalorder %s12, 2
      // Predicated region
      $region21: #{tpu_custom_call.1} parent=5 // pred_check
        %p144 = pneg %p143
      $region22: #{tpu_custom_call.1} parent=5 // pred_check_branch
        %146 = sbr.rel (%p144) target = $region24
      $region23: #{tpu_custom_call.1} parent=5 // pred_region
        // Predicated region
        $region25: #{tpu_custom_call.1} parent=23 // pred_check
          %p147 = pneg %p46
        $region26: #{tpu_custom_call.1} parent=23 // pred_check_branch
          %149 = sbr.rel (%p147) target = $region28
        $region27: #{tpu_custom_call.1} parent=23 // pred_region
          %s150 = sadd.s32 %s19, %s20
          %p151 = scmp.lt.s32.totalorder %s150, 1
          %s152 = scalar_select %p151, %s150, 1
          %s153 = smul.addr %s152, 57
          %s154 = smul.addr %s153, 4
          %s155 = scalar_lea.vmem %s0, %s154
          %s156 = sadd.s32 %s19, %s20
        $region28: #{tpu_custom_call.1} parent=23 // pred_fallthru
          _
      $region24: #{tpu_custom_call.1} parent=5 // pred_fallthru
        _
      %p157 = scmp.le.s32.totalorder 1, %s12
      %p158 = scmp.lt.s32.totalorder %s12, 3
      %p159 = pnand %p157, %p158
      %p160 = pneg %p159
      // Predicated region
      $region29: #{tpu_custom_call.1} parent=5 // pred_check
        _
      $region30: #{tpu_custom_call.1} parent=5 // pred_check_branch
        %162 = sbr.rel (%p159) target = $region32
      $region31: #{tpu_custom_call.1} parent=5 // pred_region
        %s163 = ssub.s32 %s12, 1
        %s164 = sadd.s32 %s21, %s22
        %p165 = scmp.lt.s32.totalorder %s164, 1
        %s166 = scalar_select %p165, %s164, 1
        %s167 = smul.addr %s166, 57
        %s168 = smul.addr %s167, 4
        %s169 = scalar_lea.vmem %s0, %s168
        %p170 = pneg %p52
        %p171 = pneg %p49
        %p172 = pneg %p73
        %p173 = pneg %p70
        %p174 = pneg %p94
        %p175 = pneg %p91
        %p176 = pneg %p122
        %p177 = pneg %p119
        %s178 = sand.u32 %s109, 1
        %s179 = scalar_lea.sflag [#allocation3], %s178
        %s180 = sand.u32 %s109, 1
        %s181 = smul.addr %s180, 384
        %s182 = scalar_lea.vmem [#allocation2], %s181
        %s183 = sadd.s32 %s21, %s22
        %p184 = scmp.lt.s32.totalorder %s183, 1
        %s185 = scalar_select %p184, %s183, 1
        %s186 = smul.addr %s185, 57
        %s187 = smul.addr %s186, 4
        %s188 = scalar_lea.vmem %s0, %s187
        %s189 = sadd.s32 %s21, %s22
        %s190 = sadd.s32 %s21, %s22
        %v192 = vld [vmem:[%s188] sm:$0xf]
        %v193 = vld [vmem:[%s188 + $0x4] sm:$0xf]
        %v194 = vld [vmem:[%s188 + $0x8] sm:$0xf]
        %v195 = vld [vmem:[%s188 + $0xc] sm:$0xf]
        %v196 = vld [vmem:[%s188 + $0x10] sm:$0xf]
        %v197 = vld [vmem:[%s188 + $0x14] sm:$0xf]
        %v198 = vld [vmem:[%s188 + $0x18] sm:$0xf]
        %v199 = vld [vmem:[%s188 + $0x1c] sm:$0xf]
        %v200 = vld [vmem:[%s188 + $0x20] sm:$0xf]
        %v201 = vld [vmem:[%s188 + $0x24] sm:$0xf]
        %v202 = vld [vmem:[%s188 + $0x28] sm:$0xf]
        %v203 = vld [vmem:[%s188 + $0x2c] sm:$0xf]
        %v204 = vld [vmem:[%s188 + $0x30] sm:$0xf]
        %v205 = vld [vmem:[%s188 + $0x34] sm:$0xf]
        %v206 = vld [vmem:[%s188 + $0x38] sm:$0xf]
        %v207 = vld [vmem:[%s188 + $0x3c] sm:$0xf]
        %v208 = vld [vmem:[%s188 + $0x40] sm:$0xf]
        %v209 = vld [vmem:[%s188 + $0x44] sm:$0xf]
        %v210 = vld [vmem:[%s188 + $0x48] sm:$0xf]
        %v211 = vld [vmem:[%s188 + $0x4c] sm:$0xf]
        %v212 = vld [vmem:[%s188 + $0x50] sm:$0xf]
        %v213 = vld [vmem:[%s188 + $0x54] sm:$0xf]
        %v214 = vld [vmem:[%s188 + $0x58] sm:$0xf]
        %v215 = vld [vmem:[%s188 + $0x5c] sm:$0xf]
        %v216 = vld [vmem:[%s188 + $0x60] sm:$0xf]
        %v217 = vld [vmem:[%s188 + $0x64] sm:$0xf]
        %v218 = vld [vmem:[%s188 + $0x68] sm:$0xf]
        %v219 = vld [vmem:[%s188 + $0x6c] sm:$0xf]
        %v220 = vld [vmem:[%s188 + $0x70] sm:$0xf]
        %v221 = vld [vmem:[%s188 + $0x74] sm:$0xf]
        %v222 = vld [vmem:[%s188 + $0x78] sm:$0xf]
        %v223 = vld [vmem:[%s188 + $0x7c] sm:$0xf]
        %v224 = vld [vmem:[%s188 + $0x80] sm:$0xf]
        %v225 = vld [vmem:[%s188 + $0x84] sm:$0xf]
        %v226 = vld [vmem:[%s188 + $0x88] sm:$0xf]
        %v227 = vld [vmem:[%s188 + $0x8c] sm:$0xf]
        %v228 = vld [vmem:[%s188 + $0x90] sm:$0xf]
        %v229 = vld [vmem:[%s188 + $0x94] sm:$0xf]
        %v230 = vld [vmem:[%s188 + $0x98] sm:$0xf]
        %v231 = vld [vmem:[%s188 + $0x9c] sm:$0xf]
        %v232 = vld [vmem:[%s188 + $0xa0] sm:$0xf]
        %v233 = vld [vmem:[%s188 + $0xa4] sm:$0xf]
        %v234 = vld [vmem:[%s188 + $0xa8] sm:$0xf]
        %v235 = vld [vmem:[%s188 + $0xac] sm:$0xf]
        %v236 = vld [vmem:[%s188 + $0xb0] sm:$0xf]
        %v237 = vld [vmem:[%s188 + $0xb4] sm:$0xf]
        %v238 = vld [vmem:[%s188 + $0xb8] sm:$0xf]
        %v239 = vld [vmem:[%s188 + $0xbc] sm:$0xf]
        %v240 = vld [vmem:[%s188 + $0xc0] sm:$0xf]
        %v241 = vld [vmem:[%s188 + $0xc4] sm:$0xf]
        %v242 = vld [vmem:[%s188 + $0xc8] sm:$0xf]
        %v243 = vld [vmem:[%s188 + $0xcc] sm:$0xf]
        %v244 = vld [vmem:[%s188 + $0xd0] sm:$0xf]
        %v245 = vld [vmem:[%s188 + $0xd4] sm:$0xf]
        %v246 = vld [vmem:[%s188 + $0xd8] sm:$0xf]
        %v247 = vld [vmem:[%s2] sm:$0x1]
        %v249 = vperm.slane %v247, 0
        %v251 = vld [vmem:[%s1] sm:$0xf]
        %v300 = vunpack.c.l.b16 %v192
        %v301 = vunpack.c.l.b16 %v193
        %v302 = vunpack.c.l.b16 %v194
        %v303 = vunpack.c.l.b16 %v195
        %v304 = vunpack.c.l.b16 %v196
        %v305 = vunpack.c.l.b16 %v197
        %v306 = vunpack.c.l.b16 %v198
        %v307 = vunpack.c.l.b16 %v199
        %v308 = vunpack.c.l.b16 %v200
        %v309 = vunpack.c.l.b16 %v201
        %v310 = vunpack.c.l.b16 %v202
        %v311 = vunpack.c.l.b16 %v203
        %v312 = vunpack.c.l.b16 %v204
        %v313 = vunpack.c.l.b16 %v205
        %v314 = vunpack.c.l.b16 %v206
        %v315 = vunpack.c.l.b16 %v207
        %v316 = vunpack.c.l.b16 %v208
        %v317 = vunpack.c.l.b16 %v209
        %v318 = vunpack.c.l.b16 %v210
        %v319 = vunpack.c.l.b16 %v211
        %v320 = vunpack.c.l.b16 %v212
        %v321 = vunpack.c.l.b16 %v213
        %v322 = vunpack.c.l.b16 %v214
        %v323 = vunpack.c.l.b16 %v215
        %v324 = vunpack.c.l.b16 %v216
        %v325 = vunpack.c.l.b16 %v217
        %v326 = vunpack.c.l.b16 %v218
        %v327 = vunpack.c.l.b16 %v219
        %v328 = vunpack.c.l.b16 %v220
        %v329 = vunpack.c.l.b16 %v221
        %v330 = vunpack.c.l.b16 %v222
        %v331 = vunpack.c.l.b16 %v223
        %v332 = vunpack.c.l.b16 %v224
        %v333 = vunpack.c.l.b16 %v225
        %v334 = vunpack.c.l.b16 %v226
        %v335 = vunpack.c.l.b16 %v227
        %v336 = vunpack.c.l.b16 %v228
        %v337 = vunpack.c.l.b16 %v229
        %v338 = vunpack.c.l.b16 %v230
        %v339 = vunpack.c.l.b16 %v231
        %v340 = vunpack.c.l.b16 %v232
        %v341 = vunpack.c.l.b16 %v233
        %v342 = vunpack.c.l.b16 %v234
        %v343 = vunpack.c.l.b16 %v235
        %v344 = vunpack.c.l.b16 %v236
        %v345 = vunpack.c.l.b16 %v237
        %v346 = vunpack.c.l.b16 %v238
        %v347 = vunpack.c.l.b16 %v239
        %v348 = vpack.c.b16 %v301, %v300
        %v349 = vpack.c.b16 %v303, %v302
        %v350 = vpack.c.b16 %v305, %v304
        %v351 = vpack.c.b16 %v307, %v306
        %v352 = vpack.c.b16 %v309, %v308
        %v353 = vpack.c.b16 %v311, %v310
        %v354 = vpack.c.b16 %v313, %v312
        %v355 = vpack.c.b16 %v315, %v314
        %v356 = vpack.c.b16 %v317, %v316
        %v357 = vpack.c.b16 %v319, %v318
        %v358 = vpack.c.b16 %v321, %v320
        %v359 = vpack.c.b16 %v323, %v322
        %v360 = vpack.c.b16 %v325, %v324
        %v361 = vpack.c.b16 %v327, %v326
        %v362 = vpack.c.b16 %v329, %v328
        %v363 = vpack.c.b16 %v331, %v330
        %v364 = vpack.c.b16 %v333, %v332
        %v365 = vpack.c.b16 %v335, %v334
        %v366 = vpack.c.b16 %v337, %v336
        %v367 = vpack.c.b16 %v339, %v338
        %v368 = vpack.c.b16 %v341, %v340
        %v369 = vpack.c.b16 %v343, %v342
        %v370 = vpack.c.b16 %v345, %v344
        %v371 = vpack.c.b16 %v347, %v346
        %vm372 = vcmask 64512
        %v374 = vsel %vm372, %v348, 0
        %v377 = vsel %vm372, %v349, 0
        %v380 = vsel %vm372, %v350, 0
        %v383 = vsel %vm372, %v351, 0
        %v386 = vsel %vm372, %v352, 0
        %v389 = vsel %vm372, %v353, 0
        %v392 = vsel %vm372, %v354, 0
        %v395 = vsel %vm372, %v355, 0
        %v398 = vsel %vm372, %v356, 0
        %v401 = vsel %vm372, %v357, 0
        %v404 = vsel %vm372, %v358, 0
        %v407 = vsel %vm372, %v359, 0
        %v410 = vsel %vm372, %v360, 0
        %v413 = vsel %vm372, %v361, 0
        %v416 = vsel %vm372, %v362, 0
        %v419 = vsel %vm372, %v363, 0
        %v422 = vsel %vm372, %v364, 0
        %v425 = vsel %vm372, %v365, 0
        %v428 = vsel %vm372, %v366, 0
        %v431 = vsel %vm372, %v367, 0
        %v434 = vsel %vm372, %v368, 0
        %v437 = vsel %vm372, %v369, 0
        %v440 = vsel %vm372, %v370, 0
        %v443 = vsel %vm372, %v371, 0
        %vm445 = vcmask 1043456
        %v447 = vsel %vm445, %v251, 0
        %449 = vmatpush.bf16.msra.mxu0 0
        %450 = vmatpush.bf16.msra.mxu0 0
        %451 = vmatpush.bf16.msra.mxu0 0
        %452 = vmatpush.bf16.msra.mxu0 0
        %453 = vmatpush.bf16.msra.mxu0 0
        %454 = vmatpush.bf16.msra.mxu0 0
        %455 = vmatpush.bf16.msra.mxu0 0
        %456 = vmatpush.bf16.msra.mxu0 %v447
        %457 = vmatmul.bf16.gmra.mxu0 %v374
        %v458 = vpop.f32.mrf.mxu0
        %v459 = vadd.f32 0.0, %v458
        %v460 = vpop.f32.mrf.mxu0
        %v461 = vadd.f32 0.0, %v460
        %462 = vmatmul.bf16.gmra.mxu0 %v377
        %v463 = vpop.f32.mrf.mxu0
        %v464 = vadd.f32 0.0, %v463
        %v465 = vpop.f32.mrf.mxu0
        %v466 = vadd.f32 0.0, %v465
        %467 = vmatmul.bf16.gmra.mxu0 %v380
        %v468 = vpop.f32.mrf.mxu0
        %v469 = vadd.f32 0.0, %v468
        %v470 = vpop.f32.mrf.mxu0
        %v471 = vadd.f32 0.0, %v470
        %472 = vmatmul.bf16.gmra.mxu0 %v383
        %v473 = vpop.f32.mrf.mxu0
        %v474 = vadd.f32 0.0, %v473
        %v475 = vpop.f32.mrf.mxu0
        %v476 = vadd.f32 0.0, %v475
        %477 = vmatmul.bf16.gmra.mxu0 %v386
        %v478 = vpop.f32.mrf.mxu0
        %v479 = vadd.f32 0.0, %v478
        %v480 = vpop.f32.mrf.mxu0
        %v481 = vadd.f32 0.0, %v480
        %482 = vmatmul.bf16.gmra.mxu0 %v389
        %v483 = vpop.f32.mrf.mxu0
        %v484 = vadd.f32 0.0, %v483
        %v485 = vpop.f32.mrf.mxu0
        %v486 = vadd.f32 0.0, %v485
        %487 = vmatmul.bf16.gmra.mxu0 %v392
        %v488 = vpop.f32.mrf.mxu0
        %v489 = vadd.f32 0.0, %v488
        %v490 = vpop.f32.mrf.mxu0
        %v491 = vadd.f32 0.0, %v490
        %492 = vmatmul.bf16.gmra.mxu0 %v395
        %v493 = vpop.f32.mrf.mxu0
        %v494 = vadd.f32 0.0, %v493
        %v495 = vpop.f32.mrf.mxu0
        %v496 = vadd.f32 0.0, %v495
        %497 = vmatmul.bf16.gmra.mxu0 %v398
        %v498 = vpop.f32.mrf.mxu0
        %v499 = vadd.f32 0.0, %v498
        %v500 = vpop.f32.mrf.mxu0
        %v501 = vadd.f32 0.0, %v500
        %502 = vmatmul.bf16.gmra.mxu0 %v401
        %v503 = vpop.f32.mrf.mxu0
        %v504 = vadd.f32 0.0, %v503
        %v505 = vpop.f32.mrf.mxu0
        %v506 = vadd.f32 0.0, %v505
        %507 = vmatmul.bf16.gmra.mxu0 %v404
        %v508 = vpop.f32.mrf.mxu0
        %v509 = vadd.f32 0.0, %v508
        %v510 = vpop.f32.mrf.mxu0
        %v511 = vadd.f32 0.0, %v510
        %512 = vmatmul.bf16.gmra.mxu0 %v407
        %v513 = vpop.f32.mrf.mxu0
        %v514 = vadd.f32 0.0, %v513
        %v515 = vpop.f32.mrf.mxu0
        %v516 = vadd.f32 0.0, %v515
        %517 = vmatmul.bf16.gmra.mxu0 %v410
        %v518 = vpop.f32.mrf.mxu0
        %v519 = vadd.f32 0.0, %v518
        %v520 = vpop.f32.mrf.mxu0
        %v521 = vadd.f32 0.0, %v520
        %522 = vmatmul.bf16.gmra.mxu0 %v413
        %v523 = vpop.f32.mrf.mxu0
        %v524 = vadd.f32 0.0, %v523
        %v525 = vpop.f32.mrf.mxu0
        %v526 = vadd.f32 0.0, %v525
        %527 = vmatmul.bf16.gmra.mxu0 %v416
        %v528 = vpop.f32.mrf.mxu0
        %v529 = vadd.f32 0.0, %v528
        %v530 = vpop.f32.mrf.mxu0
        %v531 = vadd.f32 0.0, %v530
        %532 = vmatmul.bf16.gmra.mxu0 %v419
        %v533 = vpop.f32.mrf.mxu0
        %v534 = vadd.f32 0.0, %v533
        %v535 = vpop.f32.mrf.mxu0
        %v536 = vadd.f32 0.0, %v535
        %537 = vmatmul.bf16.gmra.mxu0 %v422
        %v538 = vpop.f32.mrf.mxu0
        %v539 = vadd.f32 0.0, %v538
        %v540 = vpop.f32.mrf.mxu0
        %v541 = vadd.f32 0.0, %v540
        %542 = vmatmul.bf16.gmra.mxu0 %v425
        %v543 = vpop.f32.mrf.mxu0
        %v544 = vadd.f32 0.0, %v543
        %v545 = vpop.f32.mrf.mxu0
        %v546 = vadd.f32 0.0, %v545
        %547 = vmatmul.bf16.gmra.mxu0 %v428
        %v548 = vpop.f32.mrf.mxu0
        %v549 = vadd.f32 0.0, %v548
        %v550 = vpop.f32.mrf.mxu0
        %v551 = vadd.f32 0.0, %v550
        %552 = vmatmul.bf16.gmra.mxu0 %v431
        %v553 = vpop.f32.mrf.mxu0
        %v554 = vadd.f32 0.0, %v553
        %v555 = vpop.f32.mrf.mxu0
        %v556 = vadd.f32 0.0, %v555
        %557 = vmatmul.bf16.gmra.mxu0 %v434
        %v558 = vpop.f32.mrf.mxu0
        %v559 = vadd.f32 0.0, %v558
        %v560 = vpop.f32.mrf.mxu0
        %v561 = vadd.f32 0.0, %v560
        %562 = vmatmul.bf16.gmra.mxu0 %v437
        %v563 = vpop.f32.mrf.mxu0
        %v564 = vadd.f32 0.0, %v563
        %v565 = vpop.f32.mrf.mxu0
        %v566 = vadd.f32 0.0, %v565
        %567 = vmatmul.bf16.gmra.mxu0 %v440
        %v568 = vpop.f32.mrf.mxu0
        %v569 = vadd.f32 0.0, %v568
        %v570 = vpop.f32.mrf.mxu0
        %v571 = vadd.f32 0.0, %v570
        %572 = vmatmul.bf16.gmra.mxu0 %v443
        %v573 = vpop.f32.mrf.mxu0
        %v574 = vadd.f32 0.0, %v573
        %v575 = vpop.f32.mrf.mxu0
        %v576 = vadd.f32 0.0, %v575
        %577 = vdwg.mxu0
        %v578 = vadd.f32 %v249, %v459
        %v579 = vadd.f32 %v249, %v461
        %v580 = vadd.f32 %v249, %v464
        %v581 = vadd.f32 %v249, %v466
        %v582 = vadd.f32 %v249, %v469
        %v583 = vadd.f32 %v249, %v471
        %v584 = vadd.f32 %v249, %v474
        %v585 = vadd.f32 %v249, %v476
        %v586 = vadd.f32 %v249, %v479
        %v587 = vadd.f32 %v249, %v481
        %v588 = vadd.f32 %v249, %v484
        %v589 = vadd.f32 %v249, %v486
        %v590 = vadd.f32 %v249, %v489
        %v591 = vadd.f32 %v249, %v491
        %v592 = vadd.f32 %v249, %v494
        %v593 = vadd.f32 %v249, %v496
        %v594 = vadd.f32 %v249, %v499
        %v595 = vadd.f32 %v249, %v501
        %v596 = vadd.f32 %v249, %v504
        %v597 = vadd.f32 %v249, %v506
        %v598 = vadd.f32 %v249, %v509
        %v599 = vadd.f32 %v249, %v511
        %v600 = vadd.f32 %v249, %v514
        %v601 = vadd.f32 %v249, %v516
        %v602 = vadd.f32 %v249, %v519
        %v603 = vadd.f32 %v249, %v521
        %v604 = vadd.f32 %v249, %v524
        %v605 = vadd.f32 %v249, %v526
        %v606 = vadd.f32 %v249, %v529
        %v607 = vadd.f32 %v249, %v531
        %v608 = vadd.f32 %v249, %v534
        %v609 = vadd.f32 %v249, %v536
        %v610 = vadd.f32 %v249, %v539
        %v611 = vadd.f32 %v249, %v541
        %v612 = vadd.f32 %v249, %v544
        %v613 = vadd.f32 %v249, %v546
        %v614 = vadd.f32 %v249, %v549
        %v615 = vadd.f32 %v249, %v551
        %v616 = vadd.f32 %v249, %v554
        %v617 = vadd.f32 %v249, %v556
        %v618 = vadd.f32 %v249, %v559
        %v619 = vadd.f32 %v249, %v561
        %v620 = vadd.f32 %v249, %v564
        %v621 = vadd.f32 %v249, %v566
        %v622 = vadd.f32 %v249, %v569
        %v623 = vadd.f32 %v249, %v571
        %v624 = vadd.f32 %v249, %v574
        %v625 = vadd.f32 %v249, %v576
        %s626 = scalar_lea.vmem %s1, 4
        %v627 = vld [vmem:[%s626] sm:$0xf]
        %v629 = vunpack.c.l.b16 %v240
        %v630 = vpack.c.b16 %v629, %v629
        %vm631 = vsmask.f32 7424
        %v632 = vshrl.u32 %v348, 16
        %v634 = vshll.u32 %v348, 16
        %v636 = vrot.slane %v634, 1
        %v637 = vor.u32 %v632, %v636
        %v638 = vshll.u32 %v349, 16
        %v640 = vrot.slane %v638, 1
        %v641 = vsel %vm631, %v637, %v640
        %v642 = vshrl.u32 %v349, 16
        %v644 = vor.u32 %v642, %v640
        %v645 = vshll.u32 %v350, 16
        %v647 = vrot.slane %v645, 1
        %v648 = vsel %vm631, %v644, %v647
        %v649 = vshrl.u32 %v350, 16
        %v651 = vor.u32 %v649, %v647
        %v652 = vshll.u32 %v351, 16
        %v654 = vrot.slane %v652, 1
        %v655 = vsel %vm631, %v651, %v654
        %v656 = vshrl.u32 %v351, 16
        %v658 = vor.u32 %v656, %v654
        %v659 = vshll.u32 %v352, 16
        %v661 = vrot.slane %v659, 1
        %v662 = vsel %vm631, %v658, %v661
        %v663 = vshrl.u32 %v352, 16
        %v665 = vor.u32 %v663, %v661
        %v666 = vshll.u32 %v353, 16
        %v668 = vrot.slane %v666, 1
        %v669 = vsel %vm631, %v665, %v668
        %v670 = vshrl.u32 %v353, 16
        %v672 = vor.u32 %v670, %v668
        %v673 = vshll.u32 %v354, 16
        %v675 = vrot.slane %v673, 1
        %v676 = vsel %vm631, %v672, %v675
        %v677 = vshrl.u32 %v354, 16
        %v679 = vor.u32 %v677, %v675
        %v680 = vshll.u32 %v355, 16
        %v682 = vrot.slane %v680, 1
        %v683 = vsel %vm631, %v679, %v682
        %v684 = vshrl.u32 %v355, 16
        %v686 = vor.u32 %v684, %v682
        %v687 = vshll.u32 %v356, 16
        %v689 = vrot.slane %v687, 1
        %v690 = vsel %vm631, %v686, %v689
        %v691 = vshrl.u32 %v356, 16
        %v693 = vor.u32 %v691, %v689
        %v694 = vshll.u32 %v357, 16
        %v696 = vrot.slane %v694, 1
        %v697 = vsel %vm631, %v693, %v696
        %v698 = vshrl.u32 %v357, 16
        %v700 = vor.u32 %v698, %v696
        %v701 = vshll.u32 %v358, 16
        %v703 = vrot.slane %v701, 1
        %v704 = vsel %vm631, %v700, %v703
        %v705 = vshrl.u32 %v358, 16
        %v707 = vor.u32 %v705, %v703
        %v708 = vshll.u32 %v359, 16
        %v710 = vrot.slane %v708, 1
        %v711 = vsel %vm631, %v707, %v710
        %v712 = vshrl.u32 %v359, 16
        %v714 = vor.u32 %v712, %v710
        %v715 = vshll.u32 %v360, 16
        %v717 = vrot.slane %v715, 1
        %v718 = vsel %vm631, %v714, %v717
        %v719 = vshrl.u32 %v360, 16
        %v721 = vor.u32 %v719, %v717
        %v722 = vshll.u32 %v361, 16
        %v724 = vrot.slane %v722, 1
        %v725 = vsel %vm631, %v721, %v724
        %v726 = vshrl.u32 %v361, 16
        %v728 = vor.u32 %v726, %v724
        %v729 = vshll.u32 %v362, 16
        %v731 = vrot.slane %v729, 1
        %v732 = vsel %vm631, %v728, %v731
        %v733 = vshrl.u32 %v362, 16
        %v735 = vor.u32 %v733, %v731
        %v736 = vshll.u32 %v363, 16
        %v738 = vrot.slane %v736, 1
        %v739 = vsel %vm631, %v735, %v738
        %v740 = vshrl.u32 %v363, 16
        %v742 = vor.u32 %v740, %v738
        %v743 = vshll.u32 %v364, 16
        %v745 = vrot.slane %v743, 1
        %v746 = vsel %vm631, %v742, %v745
        %v747 = vshrl.u32 %v364, 16
        %v749 = vor.u32 %v747, %v745
        %v750 = vshll.u32 %v365, 16
        %v752 = vrot.slane %v750, 1
        %v753 = vsel %vm631, %v749, %v752
        %v754 = vshrl.u32 %v365, 16
        %v756 = vor.u32 %v754, %v752
        %v757 = vshll.u32 %v366, 16
        %v759 = vrot.slane %v757, 1
        %v760 = vsel %vm631, %v756, %v759
        %v761 = vshrl.u32 %v366, 16
        %v763 = vor.u32 %v761, %v759
        %v764 = vshll.u32 %v367, 16
        %v766 = vrot.slane %v764, 1
        %v767 = vsel %vm631, %v763, %v766
        %v768 = vshrl.u32 %v367, 16
        %v770 = vor.u32 %v768, %v766
        %v771 = vshll.u32 %v368, 16
        %v773 = vrot.slane %v771, 1
        %v774 = vsel %vm631, %v770, %v773
        %v775 = vshrl.u32 %v368, 16
        %v777 = vor.u32 %v775, %v773
        %v778 = vshll.u32 %v369, 16
        %v780 = vrot.slane %v778, 1
        %v781 = vsel %vm631, %v777, %v780
        %v782 = vshrl.u32 %v369, 16
        %v784 = vor.u32 %v782, %v780
        %v785 = vshll.u32 %v370, 16
        %v787 = vrot.slane %v785, 1
        %v788 = vsel %vm631, %v784, %v787
        %v789 = vshrl.u32 %v370, 16
        %v791 = vor.u32 %v789, %v787
        %v792 = vshll.u32 %v371, 16
        %v794 = vrot.slane %v792, 1
        %v795 = vsel %vm631, %v791, %v794
        %v796 = vshrl.u32 %v371, 16
        %v798 = vor.u32 %v796, %v794
        %v800 = vshll.u32 %v630, 16
        %v802 = vrot.slane %v800, 1
        %v803 = vsel %vm631, %v798, %v802
        %v805 = vsel %vm372, %v641, 0
        %v808 = vsel %vm372, %v648, 0
        %v811 = vsel %vm372, %v655, 0
        %v814 = vsel %vm372, %v662, 0
        %v817 = vsel %vm372, %v669, 0
        %v820 = vsel %vm372, %v676, 0
        %v823 = vsel %vm372, %v683, 0
        %v826 = vsel %vm372, %v690, 0
        %v829 = vsel %vm372, %v697, 0
        %v832 = vsel %vm372, %v704, 0
        %v835 = vsel %vm372, %v711, 0
        %v838 = vsel %vm372, %v718, 0
        %v841 = vsel %vm372, %v725, 0
        %v844 = vsel %vm372, %v732, 0
        %v847 = vsel %vm372, %v739, 0
        %v850 = vsel %vm372, %v746, 0
        %v853 = vsel %vm372, %v753, 0
        %v856 = vsel %vm372, %v760, 0
        %v859 = vsel %vm372, %v767, 0
        %v862 = vsel %vm372, %v774, 0
        %v865 = vsel %vm372, %v781, 0
        %v868 = vsel %vm372, %v788, 0
        %v871 = vsel %vm372, %v795, 0
        %v874 = vsel %vm372, %v803, 0
        %v877 = vsel %vm445, %v627, 0
        %879 = vmatpush.bf16.msra.mxu0 0
        %880 = vmatpush.bf16.msra.mxu0 0
        %881 = vmatpush.bf16.msra.mxu0 0
        %882 = vmatpush.bf16.msra.mxu0 0
        %883 = vmatpush.bf16.msra.mxu0 0
        %884 = vmatpush.bf16.msra.mxu0 0
        %885 = vmatpush.bf16.msra.mxu0 0
        %886 = vmatpush.bf16.msra.mxu0 %v877
        %887 = vmatmul.bf16.gmra.mxu0 %v805
        %v888 = vpop.f32.mrf.mxu0
        %v889 = vadd.f32 0.0, %v888
        %v890 = vpop.f32.mrf.mxu0
        %v891 = vadd.f32 0.0, %v890
        %892 = vmatmul.bf16.gmra.mxu0 %v808
        %v893 = vpop.f32.mrf.mxu0
        %v894 = vadd.f32 0.0, %v893
        %v895 = vpop.f32.mrf.mxu0
        %v896 = vadd.f32 0.0, %v895
        %897 = vmatmul.bf16.gmra.mxu0 %v811
        %v898 = vpop.f32.mrf.mxu0
        %v899 = vadd.f32 0.0, %v898
        %v900 = vpop.f32.mrf.mxu0
        %v901 = vadd.f32 0.0, %v900
        %902 = vmatmul.bf16.gmra.mxu0 %v814
        %v903 = vpop.f32.mrf.mxu0
        %v904 = vadd.f32 0.0, %v903
        %v905 = vpop.f32.mrf.mxu0
        %v906 = vadd.f32 0.0, %v905
        %907 = vmatmul.bf16.gmra.mxu0 %v817
        %v908 = vpop.f32.mrf.mxu0
        %v909 = vadd.f32 0.0, %v908
        %v910 = vpop.f32.mrf.mxu0
        %v911 = vadd.f32 0.0, %v910
        %912 = vmatmul.bf16.gmra.mxu0 %v820
        %v913 = vpop.f32.mrf.mxu0
        %v914 = vadd.f32 0.0, %v913
        %v915 = vpop.f32.mrf.mxu0
        %v916 = vadd.f32 0.0, %v915
        %917 = vmatmul.bf16.gmra.mxu0 %v823
        %v918 = vpop.f32.mrf.mxu0
        %v919 = vadd.f32 0.0, %v918
        %v920 = vpop.f32.mrf.mxu0
        %v921 = vadd.f32 0.0, %v920
        %922 = vmatmul.bf16.gmra.mxu0 %v826
        %v923 = vpop.f32.mrf.mxu0
        %v924 = vadd.f32 0.0, %v923
        %v925 = vpop.f32.mrf.mxu0
        %v926 = vadd.f32 0.0, %v925
        %927 = vmatmul.bf16.gmra.mxu0 %v829
        %v928 = vpop.f32.mrf.mxu0
        %v929 = vadd.f32 0.0, %v928
        %v930 = vpop.f32.mrf.mxu0
        %v931 = vadd.f32 0.0, %v930
        %932 = vmatmul.bf16.gmra.mxu0 %v832
        %v933 = vpop.f32.mrf.mxu0
        %v934 = vadd.f32 0.0, %v933
        %v935 = vpop.f32.mrf.mxu0
        %v936 = vadd.f32 0.0, %v935
        %937 = vmatmul.bf16.gmra.mxu0 %v835
        %v938 = vpop.f32.mrf.mxu0
        %v939 = vadd.f32 0.0, %v938
        %v940 = vpop.f32.mrf.mxu0
        %v941 = vadd.f32 0.0, %v940
        %942 = vmatmul.bf16.gmra.mxu0 %v838
        %v943 = vpop.f32.mrf.mxu0
        %v944 = vadd.f32 0.0, %v943
        %v945 = vpop.f32.mrf.mxu0
        %v946 = vadd.f32 0.0, %v945
        %947 = vmatmul.bf16.gmra.mxu0 %v841
        %v948 = vpop.f32.mrf.mxu0
        %v949 = vadd.f32 0.0, %v948
        %v950 = vpop.f32.mrf.mxu0
        %v951 = vadd.f32 0.0, %v950
        %952 = vmatmul.bf16.gmra.mxu0 %v844
        %v953 = vpop.f32.mrf.mxu0
        %v954 = vadd.f32 0.0, %v953
        %v955 = vpop.f32.mrf.mxu0
        %v956 = vadd.f32 0.0, %v955
        %957 = vmatmul.bf16.gmra.mxu0 %v847
        %v958 = vpop.f32.mrf.mxu0
        %v959 = vadd.f32 0.0, %v958
        %v960 = vpop.f32.mrf.mxu0
        %v961 = vadd.f32 0.0, %v960
        %962 = vmatmul.bf16.gmra.mxu0 %v850
        %v963 = vpop.f32.mrf.mxu0
        %v964 = vadd.f32 0.0, %v963
        %v965 = vpop.f32.mrf.mxu0
        %v966 = vadd.f32 0.0, %v965
        %967 = vmatmul.bf16.gmra.mxu0 %v853
        %v968 = vpop.f32.mrf.mxu0
        %v969 = vadd.f32 0.0, %v968
        %v970 = vpop.f32.mrf.mxu0
        %v971 = vadd.f32 0.0, %v970
        %972 = vmatmul.bf16.gmra.mxu0 %v856
        %v973 = vpop.f32.mrf.mxu0
        %v974 = vadd.f32 0.0, %v973
        %v975 = vpop.f32.mrf.mxu0
        %v976 = vadd.f32 0.0, %v975
        %977 = vmatmul.bf16.gmra.mxu0 %v859
        %v978 = vpop.f32.mrf.mxu0
        %v979 = vadd.f32 0.0, %v978
        %v980 = vpop.f32.mrf.mxu0
        %v981 = vadd.f32 0.0, %v980
        %982 = vmatmul.bf16.gmra.mxu0 %v862
        %v983 = vpop.f32.mrf.mxu0
        %v984 = vadd.f32 0.0, %v983
        %v985 = vpop.f32.mrf.mxu0
        %v986 = vadd.f32 0.0, %v985
        %987 = vmatmul.bf16.gmra.mxu0 %v865
        %v988 = vpop.f32.mrf.mxu0
        %v989 = vadd.f32 0.0, %v988
        %v990 = vpop.f32.mrf.mxu0
        %v991 = vadd.f32 0.0, %v990
        %992 = vmatmul.bf16.gmra.mxu0 %v868
        %v993 = vpop.f32.mrf.mxu0
        %v994 = vadd.f32 0.0, %v993
        %v995 = vpop.f32.mrf.mxu0
        %v996 = vadd.f32 0.0, %v995
        %997 = vmatmul.bf16.gmra.mxu0 %v871
        %v998 = vpop.f32.mrf.mxu0
        %v999 = vadd.f32 0.0, %v998
        %v1000 = vpop.f32.mrf.mxu0
        %v1001 = vadd.f32 0.0, %v1000
        %1002 = vmatmul.bf16.gmra.mxu0 %v874
        %v1003 = vpop.f32.mrf.mxu0
        %v1004 = vadd.f32 0.0, %v1003
        %v1005 = vpop.f32.mrf.mxu0
        %v1006 = vadd.f32 0.0, %v1005
        %1007 = vdwg.mxu0
        %v1008 = vadd.f32 %v578, %v889
        %v1009 = vadd.f32 %v579, %v891
        %v1010 = vadd.f32 %v580, %v894
        %v1011 = vadd.f32 %v581, %v896
        %v1012 = vadd.f32 %v582, %v899
        %v1013 = vadd.f32 %v583, %v901
        %v1014 = vadd.f32 %v584, %v904
        %v1015 = vadd.f32 %v585, %v906
        %v1016 = vadd.f32 %v586, %v909
        %v1017 = vadd.f32 %v587, %v911
        %v1018 = vadd.f32 %v588, %v914
        %v1019 = vadd.f32 %v589, %v916
        %v1020 = vadd.f32 %v590, %v919
        %v1021 = vadd.f32 %v591, %v921
        %v1022 = vadd.f32 %v592, %v924
        %v1023 = vadd.f32 %v593, %v926
        %v1024 = vadd.f32 %v594, %v929
        %v1025 = vadd.f32 %v595, %v931
        %v1026 = vadd.f32 %v596, %v934
        %v1027 = vadd.f32 %v597, %v936
        %v1028 = vadd.f32 %v598, %v939
        %v1029 = vadd.f32 %v599, %v941
        %v1030 = vadd.f32 %v600, %v944
        %v1031 = vadd.f32 %v601, %v946
        %v1032 = vadd.f32 %v602, %v949
        %v1033 = vadd.f32 %v603, %v951
        %v1034 = vadd.f32 %v604, %v954
        %v1035 = vadd.f32 %v605, %v956
        %v1036 = vadd.f32 %v606, %v959
        %v1037 = vadd.f32 %v607, %v961
        %v1038 = vadd.f32 %v608, %v964
        %v1039 = vadd.f32 %v609, %v966
        %v1040 = vadd.f32 %v610, %v969
        %v1041 = vadd.f32 %v611, %v971
        %v1042 = vadd.f32 %v612, %v974
        %v1043 = vadd.f32 %v613, %v976
        %v1044 = vadd.f32 %v614, %v979
        %v1045 = vadd.f32 %v615, %v981
        %v1046 = vadd.f32 %v616, %v984
        %v1047 = vadd.f32 %v617, %v986
        %v1048 = vadd.f32 %v618, %v989
        %v1049 = vadd.f32 %v619, %v991
        %v1050 = vadd.f32 %v620, %v994
        %v1051 = vadd.f32 %v621, %v996
        %v1052 = vadd.f32 %v622, %v999
        %v1053 = vadd.f32 %v623, %v1001
        %v1054 = vadd.f32 %v624, %v1004
        %v1055 = vadd.f32 %v625, %v1006
        %s1056 = scalar_lea.vmem %s1, 8
        %v1057 = vld [vmem:[%s1056] sm:$0xf]
        %vm1058 = vcmask 1046528
        %v1059 = vrot.slane %v348, 1
        %v1060 = vrot.slane %v349, 1
        %v1061 = vsel %vm1058, %v1059, %v1060
        %v1062 = vrot.slane %v350, 1
        %v1063 = vsel %vm1058, %v1060, %v1062
        %v1064 = vrot.slane %v351, 1
        %v1065 = vsel %vm1058, %v1062, %v1064
        %v1066 = vrot.slane %v352, 1
        %v1067 = vsel %vm1058, %v1064, %v1066
        %v1068 = vrot.slane %v353, 1
        %v1069 = vsel %vm1058, %v1066, %v1068
        %v1070 = vrot.slane %v354, 1
        %v1071 = vsel %vm1058, %v1068, %v1070
        %v1072 = vrot.slane %v355, 1
        %v1073 = vsel %vm1058, %v1070, %v1072
        %v1074 = vrot.slane %v356, 1
        %v1075 = vsel %vm1058, %v1072, %v1074
        %v1076 = vrot.slane %v357, 1
        %v1077 = vsel %vm1058, %v1074, %v1076
        %v1078 = vrot.slane %v358, 1
        %v1079 = vsel %vm1058, %v1076, %v1078
        %v1080 = vrot.slane %v359, 1
        %v1081 = vsel %vm1058, %v1078, %v1080
        %v1082 = vrot.slane %v360, 1
        %v1083 = vsel %vm1058, %v1080, %v1082
        %v1084 = vrot.slane %v361, 1
        %v1085 = vsel %vm1058, %v1082, %v1084
        %v1086 = vrot.slane %v362, 1
        %v1087 = vsel %vm1058, %v1084, %v1086
        %v1088 = vrot.slane %v363, 1
        %v1089 = vsel %vm1058, %v1086, %v1088
        %v1090 = vrot.slane %v364, 1
        %v1091 = vsel %vm1058, %v1088, %v1090
        %v1092 = vrot.slane %v365, 1
        %v1093 = vsel %vm1058, %v1090, %v1092
        %v1094 = vrot.slane %v366, 1
        %v1095 = vsel %vm1058, %v1092, %v1094
        %v1096 = vrot.slane %v367, 1
        %v1097 = vsel %vm1058, %v1094, %v1096
        %v1098 = vrot.slane %v368, 1
        %v1099 = vsel %vm1058, %v1096, %v1098
        %v1100 = vrot.slane %v369, 1
        %v1101 = vsel %vm1058, %v1098, %v1100
        %v1102 = vrot.slane %v370, 1
        %v1103 = vsel %vm1058, %v1100, %v1102
        %v1104 = vrot.slane %v371, 1
        %v1105 = vsel %vm1058, %v1102, %v1104
        %v1106 = vrot.slane %v630, 1
        %v1107 = vsel %vm1058, %v1104, %v1106
        %v1109 = vsel %vm372, %v1061, 0
        %v1112 = vsel %vm372, %v1063, 0
        %v1115 = vsel %vm372, %v1065, 0
        %v1118 = vsel %vm372, %v1067, 0
        %v1121 = vsel %vm372, %v1069, 0
        %v1124 = vsel %vm372, %v1071, 0
        %v1127 = vsel %vm372, %v1073, 0
        %v1130 = vsel %vm372, %v1075, 0
        %v1133 = vsel %vm372, %v1077, 0
        %v1136 = vsel %vm372, %v1079, 0
        %v1139 = vsel %vm372, %v1081, 0
        %v1142 = vsel %vm372, %v1083, 0
        %v1145 = vsel %vm372, %v1085, 0
        %v1148 = vsel %vm372, %v1087, 0
        %v1151 = vsel %vm372, %v1089, 0
        %v1154 = vsel %vm372, %v1091, 0
        %v1157 = vsel %vm372, %v1093, 0
        %v1160 = vsel %vm372, %v1095, 0
        %v1163 = vsel %vm372, %v1097, 0
        %v1166 = vsel %vm372, %v1099, 0
        %v1169 = vsel %vm372, %v1101, 0
        %v1172 = vsel %vm372, %v1103, 0
        %v1175 = vsel %vm372, %v1105, 0
        %v1178 = vsel %vm372, %v1107, 0
        %v1181 = vsel %vm445, %v1057, 0
        %1183 = vmatpush.bf16.msra.mxu0 0
        %1184 = vmatpush.bf16.msra.mxu0 0
        %1185 = vmatpush.bf16.msra.mxu0 0
        %1186 = vmatpush.bf16.msra.mxu0 0
        %1187 = vmatpush.bf16.msra.mxu0 0
        %1188 = vmatpush.bf16.msra.mxu0 0
        %1189 = vmatpush.bf16.msra.mxu0 0
        %1190 = vmatpush.bf16.msra.mxu0 %v1181
        %1191 = vmatmul.bf16.gmra.mxu0 %v1109
        %v1192 = vpop.f32.mrf.mxu0
        %v1193 = vadd.f32 0.0, %v1192
        %v1194 = vpop.f32.mrf.mxu0
        %v1195 = vadd.f32 0.0, %v1194
        %1196 = vmatmul.bf16.gmra.mxu0 %v1112
        %v1197 = vpop.f32.mrf.mxu0
        %v1198 = vadd.f32 0.0, %v1197
        %v1199 = vpop.f32.mrf.mxu0
        %v1200 = vadd.f32 0.0, %v1199
        %1201 = vmatmul.bf16.gmra.mxu0 %v1115
        %v1202 = vpop.f32.mrf.mxu0
        %v1203 = vadd.f32 0.0, %v1202
        %v1204 = vpop.f32.mrf.mxu0
        %v1205 = vadd.f32 0.0, %v1204
        %1206 = vmatmul.bf16.gmra.mxu0 %v1118
        %v1207 = vpop.f32.mrf.mxu0
        %v1208 = vadd.f32 0.0, %v1207
        %v1209 = vpop.f32.mrf.mxu0
        %v1210 = vadd.f32 0.0, %v1209
        %1211 = vmatmul.bf16.gmra.mxu0 %v1121
        %v1212 = vpop.f32.mrf.mxu0
        %v1213 = vadd.f32 0.0, %v1212
        %v1214 = vpop.f32.mrf.mxu0
        %v1215 = vadd.f32 0.0, %v1214
        %1216 = vmatmul.bf16.gmra.mxu0 %v1124
        %v1217 = vpop.f32.mrf.mxu0
        %v1218 = vadd.f32 0.0, %v1217
        %v1219 = vpop.f32.mrf.mxu0
        %v1220 = vadd.f32 0.0, %v1219
        %1221 = vmatmul.bf16.gmra.mxu0 %v1127
        %v1222 = vpop.f32.mrf.mxu0
        %v1223 = vadd.f32 0.0, %v1222
        %v1224 = vpop.f32.mrf.mxu0
        %v1225 = vadd.f32 0.0, %v1224
        %1226 = vmatmul.bf16.gmra.mxu0 %v1130
        %v1227 = vpop.f32.mrf.mxu0
        %v1228 = vadd.f32 0.0, %v1227
        %v1229 = vpop.f32.mrf.mxu0
        %v1230 = vadd.f32 0.0, %v1229
        %1231 = vmatmul.bf16.gmra.mxu0 %v1133
        %v1232 = vpop.f32.mrf.mxu0
        %v1233 = vadd.f32 0.0, %v1232
        %v1234 = vpop.f32.mrf.mxu0
        %v1235 = vadd.f32 0.0, %v1234
        %1236 = vmatmul.bf16.gmra.mxu0 %v1136
        %v1237 = vpop.f32.mrf.mxu0
        %v1238 = vadd.f32 0.0, %v1237
        %v1239 = vpop.f32.mrf.mxu0
        %v1240 = vadd.f32 0.0, %v1239
        %1241 = vmatmul.bf16.gmra.mxu0 %v1139
        %v1242 = vpop.f32.mrf.mxu0
        %v1243 = vadd.f32 0.0, %v1242
        %v1244 = vpop.f32.mrf.mxu0
        %v1245 = vadd.f32 0.0, %v1244
        %1246 = vmatmul.bf16.gmra.mxu0 %v1142
        %v1247 = vpop.f32.mrf.mxu0
        %v1248 = vadd.f32 0.0, %v1247
        %v1249 = vpop.f32.mrf.mxu0
        %v1250 = vadd.f32 0.0, %v1249
        %1251 = vmatmul.bf16.gmra.mxu0 %v1145
        %v1252 = vpop.f32.mrf.mxu0
        %v1253 = vadd.f32 0.0, %v1252
        %v1254 = vpop.f32.mrf.mxu0
        %v1255 = vadd.f32 0.0, %v1254
        %1256 = vmatmul.bf16.gmra.mxu0 %v1148
        %v1257 = vpop.f32.mrf.mxu0
        %v1258 = vadd.f32 0.0, %v1257
        %v1259 = vpop.f32.mrf.mxu0
        %v1260 = vadd.f32 0.0, %v1259
        %1261 = vmatmul.bf16.gmra.mxu0 %v1151
        %v1262 = vpop.f32.mrf.mxu0
        %v1263 = vadd.f32 0.0, %v1262
        %v1264 = vpop.f32.mrf.mxu0
        %v1265 = vadd.f32 0.0, %v1264
        %1266 = vmatmul.bf16.gmra.mxu0 %v1154
        %v1267 = vpop.f32.mrf.mxu0
        %v1268 = vadd.f32 0.0, %v1267
        %v1269 = vpop.f32.mrf.mxu0
        %v1270 = vadd.f32 0.0, %v1269
        %1271 = vmatmul.bf16.gmra.mxu0 %v1157
        %v1272 = vpop.f32.mrf.mxu0
        %v1273 = vadd.f32 0.0, %v1272
        %v1274 = vpop.f32.mrf.mxu0
        %v1275 = vadd.f32 0.0, %v1274
        %1276 = vmatmul.bf16.gmra.mxu0 %v1160
        %v1277 = vpop.f32.mrf.mxu0
        %v1278 = vadd.f32 0.0, %v1277
        %v1279 = vpop.f32.mrf.mxu0
        %v1280 = vadd.f32 0.0, %v1279
        %1281 = vmatmul.bf16.gmra.mxu0 %v1163
        %v1282 = vpop.f32.mrf.mxu0
        %v1283 = vadd.f32 0.0, %v1282
        %v1284 = vpop.f32.mrf.mxu0
        %v1285 = vadd.f32 0.0, %v1284
        %1286 = vmatmul.bf16.gmra.mxu0 %v1166
        %v1287 = vpop.f32.mrf.mxu0
        %v1288 = vadd.f32 0.0, %v1287
        %v1289 = vpop.f32.mrf.mxu0
        %v1290 = vadd.f32 0.0, %v1289
        %1291 = vmatmul.bf16.gmra.mxu0 %v1169
        %v1292 = vpop.f32.mrf.mxu0
        %v1293 = vadd.f32 0.0, %v1292
        %v1294 = vpop.f32.mrf.mxu0
        %v1295 = vadd.f32 0.0, %v1294
        %1296 = vmatmul.bf16.gmra.mxu0 %v1172
        %v1297 = vpop.f32.mrf.mxu0
        %v1298 = vadd.f32 0.0, %v1297
        %v1299 = vpop.f32.mrf.mxu0
        %v1300 = vadd.f32 0.0, %v1299
        %1301 = vmatmul.bf16.gmra.mxu0 %v1175
        %v1302 = vpop.f32.mrf.mxu0
        %v1303 = vadd.f32 0.0, %v1302
        %v1304 = vpop.f32.mrf.mxu0
        %v1305 = vadd.f32 0.0, %v1304
        %1306 = vmatmul.bf16.gmra.mxu0 %v1178
        %v1307 = vpop.f32.mrf.mxu0
        %v1308 = vadd.f32 0.0, %v1307
        %v1309 = vpop.f32.mrf.mxu0
        %v1310 = vadd.f32 0.0, %v1309
        %1311 = vdwg.mxu0
        %v1312 = vadd.f32 %v1008, %v1193
        %v1313 = vadd.f32 %v1009, %v1195
        %v1314 = vadd.f32 %v1010, %v1198
        %v1315 = vadd.f32 %v1011, %v1200
        %v1316 = vadd.f32 %v1012, %v1203
        %v1317 = vadd.f32 %v1013, %v1205
        %v1318 = vadd.f32 %v1014, %v1208
        %v1319 = vadd.f32 %v1015, %v1210
        %v1320 = vadd.f32 %v1016, %v1213
        %v1321 = vadd.f32 %v1017, %v1215
        %v1322 = vadd.f32 %v1018, %v1218
        %v1323 = vadd.f32 %v1019, %v1220
        %v1324 = vadd.f32 %v1020, %v1223
        %v1325 = vadd.f32 %v1021, %v1225
        %v1326 = vadd.f32 %v1022, %v1228
        %v1327 = vadd.f32 %v1023, %v1230
        %v1328 = vadd.f32 %v1024, %v1233
        %v1329 = vadd.f32 %v1025, %v1235
        %v1330 = vadd.f32 %v1026, %v1238
        %v1331 = vadd.f32 %v1027, %v1240
        %v1332 = vadd.f32 %v1028, %v1243
        %v1333 = vadd.f32 %v1029, %v1245
        %v1334 = vadd.f32 %v1030, %v1248
        %v1335 = vadd.f32 %v1031, %v1250
        %v1336 = vadd.f32 %v1032, %v1253
        %v1337 = vadd.f32 %v1033, %v1255
        %v1338 = vadd.f32 %v1034, %v1258
        %v1339 = vadd.f32 %v1035, %v1260
        %v1340 = vadd.f32 %v1036, %v1263
        %v1341 = vadd.f32 %v1037, %v1265
        %v1342 = vadd.f32 %v1038, %v1268
        %v1343 = vadd.f32 %v1039, %v1270
        %v1344 = vadd.f32 %v1040, %v1273
        %v1345 = vadd.f32 %v1041, %v1275
        %v1346 = vadd.f32 %v1042, %v1278
        %v1347 = vadd.f32 %v1043, %v1280
        %v1348 = vadd.f32 %v1044, %v1283
        %v1349 = vadd.f32 %v1045, %v1285
        %v1350 = vadd.f32 %v1046, %v1288
        %v1351 = vadd.f32 %v1047, %v1290
        %v1352 = vadd.f32 %v1048, %v1293
        %v1353 = vadd.f32 %v1049, %v1295
        %v1354 = vadd.f32 %v1050, %v1298
        %v1355 = vadd.f32 %v1051, %v1300
        %v1356 = vadd.f32 %v1052, %v1303
        %v1357 = vadd.f32 %v1053, %v1305
        %v1358 = vadd.f32 %v1054, %v1308
        %v1359 = vadd.f32 %v1055, %v1310
        %s1360 = scalar_lea.vmem %s1, 12
        %v1361 = vld [vmem:[%s1360] sm:$0xf]
        %v1364 = vunpack.c.l.b16 %v241
        %v1365 = vunpack.c.l.b16 %v242
        %v1366 = vpack.c.b16 %v304, %v303
        %v1367 = vpack.c.b16 %v306, %v305
        %v1368 = vpack.c.b16 %v308, %v307
        %v1369 = vpack.c.b16 %v310, %v309
        %v1370 = vpack.c.b16 %v312, %v311
        %v1371 = vpack.c.b16 %v314, %v313
        %v1372 = vpack.c.b16 %v316, %v315
        %v1373 = vpack.c.b16 %v318, %v317
        %v1374 = vpack.c.b16 %v320, %v319
        %v1375 = vpack.c.b16 %v322, %v321
        %v1376 = vpack.c.b16 %v324, %v323
        %v1377 = vpack.c.b16 %v326, %v325
        %v1378 = vpack.c.b16 %v328, %v327
        %v1379 = vpack.c.b16 %v330, %v329
        %v1380 = vpack.c.b16 %v332, %v331
        %v1381 = vpack.c.b16 %v334, %v333
        %v1382 = vpack.c.b16 %v336, %v335
        %v1383 = vpack.c.b16 %v338, %v337
        %v1384 = vpack.c.b16 %v340, %v339
        %v1385 = vpack.c.b16 %v342, %v341
        %v1386 = vpack.c.b16 %v344, %v343
        %v1387 = vpack.c.b16 %v346, %v345
        %v1388 = vpack.c.b16 %v629, %v347
        %v1389 = vpack.c.b16 %v1365, %v1364
        %v1391 = vsel %vm372, %v1366, 0
        %v1394 = vsel %vm372, %v1367, 0
        %v1397 = vsel %vm372, %v1368, 0
        %v1400 = vsel %vm372, %v1369, 0
        %v1403 = vsel %vm372, %v1370, 0
        %v1406 = vsel %vm372, %v1371, 0
        %v1409 = vsel %vm372, %v1372, 0
        %v1412 = vsel %vm372, %v1373, 0
        %v1415 = vsel %vm372, %v1374, 0
        %v1418 = vsel %vm372, %v1375, 0
        %v1421 = vsel %vm372, %v1376, 0
        %v1424 = vsel %vm372, %v1377, 0
        %v1427 = vsel %vm372, %v1378, 0
        %v1430 = vsel %vm372, %v1379, 0
        %v1433 = vsel %vm372, %v1380, 0
        %v1436 = vsel %vm372, %v1381, 0
        %v1439 = vsel %vm372, %v1382, 0
        %v1442 = vsel %vm372, %v1383, 0
        %v1445 = vsel %vm372, %v1384, 0
        %v1448 = vsel %vm372, %v1385, 0
        %v1451 = vsel %vm372, %v1386, 0
        %v1454 = vsel %vm372, %v1387, 0
        %v1457 = vsel %vm372, %v1388, 0
        %v1460 = vsel %vm372, %v1389, 0
        %v1463 = vsel %vm445, %v1361, 0
        %1465 = vmatpush.bf16.msra.mxu0 0
        %1466 = vmatpush.bf16.msra.mxu0 0
        %1467 = vmatpush.bf16.msra.mxu0 0
        %1468 = vmatpush.bf16.msra.mxu0 0
        %1469 = vmatpush.bf16.msra.mxu0 0
        %1470 = vmatpush.bf16.msra.mxu0 0
        %1471 = vmatpush.bf16.msra.mxu0 0
        %1472 = vmatpush.bf16.msra.mxu0 %v1463
        %1473 = vmatmul.bf16.gmra.mxu0 %v1391
        %v1474 = vpop.f32.mrf.mxu0
        %v1475 = vadd.f32 0.0, %v1474
        %v1476 = vpop.f32.mrf.mxu0
        %v1477 = vadd.f32 0.0, %v1476
        %1478 = vmatmul.bf16.gmra.mxu0 %v1394
        %v1479 = vpop.f32.mrf.mxu0
        %v1480 = vadd.f32 0.0, %v1479
        %v1481 = vpop.f32.mrf.mxu0
        %v1482 = vadd.f32 0.0, %v1481
        %1483 = vmatmul.bf16.gmra.mxu0 %v1397
        %v1484 = vpop.f32.mrf.mxu0
        %v1485 = vadd.f32 0.0, %v1484
        %v1486 = vpop.f32.mrf.mxu0
        %v1487 = vadd.f32 0.0, %v1486
        %1488 = vmatmul.bf16.gmra.mxu0 %v1400
        %v1489 = vpop.f32.mrf.mxu0
        %v1490 = vadd.f32 0.0, %v1489
        %v1491 = vpop.f32.mrf.mxu0
        %v1492 = vadd.f32 0.0, %v1491
        %1493 = vmatmul.bf16.gmra.mxu0 %v1403
        %v1494 = vpop.f32.mrf.mxu0
        %v1495 = vadd.f32 0.0, %v1494
        %v1496 = vpop.f32.mrf.mxu0
        %v1497 = vadd.f32 0.0, %v1496
        %1498 = vmatmul.bf16.gmra.mxu0 %v1406
        %v1499 = vpop.f32.mrf.mxu0
        %v1500 = vadd.f32 0.0, %v1499
        %v1501 = vpop.f32.mrf.mxu0
        %v1502 = vadd.f32 0.0, %v1501
        %1503 = vmatmul.bf16.gmra.mxu0 %v1409
        %v1504 = vpop.f32.mrf.mxu0
        %v1505 = vadd.f32 0.0, %v1504
        %v1506 = vpop.f32.mrf.mxu0
        %v1507 = vadd.f32 0.0, %v1506
        %1508 = vmatmul.bf16.gmra.mxu0 %v1412
        %v1509 = vpop.f32.mrf.mxu0
        %v1510 = vadd.f32 0.0, %v1509
        %v1511 = vpop.f32.mrf.mxu0
        %v1512 = vadd.f32 0.0, %v1511
        %1513 = vmatmul.bf16.gmra.mxu0 %v1415
        %v1514 = vpop.f32.mrf.mxu0
        %v1515 = vadd.f32 0.0, %v1514
        %v1516 = vpop.f32.mrf.mxu0
        %v1517 = vadd.f32 0.0, %v1516
        %1518 = vmatmul.bf16.gmra.mxu0 %v1418
        %v1519 = vpop.f32.mrf.mxu0
        %v1520 = vadd.f32 0.0, %v1519
        %v1521 = vpop.f32.mrf.mxu0
        %v1522 = vadd.f32 0.0, %v1521
        %1523 = vmatmul.bf16.gmra.mxu0 %v1421
        %v1524 = vpop.f32.mrf.mxu0
        %v1525 = vadd.f32 0.0, %v1524
        %v1526 = vpop.f32.mrf.mxu0
        %v1527 = vadd.f32 0.0, %v1526
        %1528 = vmatmul.bf16.gmra.mxu0 %v1424
        %v1529 = vpop.f32.mrf.mxu0
        %v1530 = vadd.f32 0.0, %v1529
        %v1531 = vpop.f32.mrf.mxu0
        %v1532 = vadd.f32 0.0, %v1531
        %1533 = vmatmul.bf16.gmra.mxu0 %v1427
        %v1534 = vpop.f32.mrf.mxu0
        %v1535 = vadd.f32 0.0, %v1534
        %v1536 = vpop.f32.mrf.mxu0
        %v1537 = vadd.f32 0.0, %v1536
        %1538 = vmatmul.bf16.gmra.mxu0 %v1430
        %v1539 = vpop.f32.mrf.mxu0
        %v1540 = vadd.f32 0.0, %v1539
        %v1541 = vpop.f32.mrf.mxu0
        %v1542 = vadd.f32 0.0, %v1541
        %1543 = vmatmul.bf16.gmra.mxu0 %v1433
        %v1544 = vpop.f32.mrf.mxu0
        %v1545 = vadd.f32 0.0, %v1544
        %v1546 = vpop.f32.mrf.mxu0
        %v1547 = vadd.f32 0.0, %v1546
        %1548 = vmatmul.bf16.gmra.mxu0 %v1436
        %v1549 = vpop.f32.mrf.mxu0
        %v1550 = vadd.f32 0.0, %v1549
        %v1551 = vpop.f32.mrf.mxu0
        %v1552 = vadd.f32 0.0, %v1551
        %1553 = vmatmul.bf16.gmra.mxu0 %v1439
        %v1554 = vpop.f32.mrf.mxu0
        %v1555 = vadd.f32 0.0, %v1554
        %v1556 = vpop.f32.mrf.mxu0
        %v1557 = vadd.f32 0.0, %v1556
        %1558 = vmatmul.bf16.gmra.mxu0 %v1442
        %v1559 = vpop.f32.mrf.mxu0
        %v1560 = vadd.f32 0.0, %v1559
        %v1561 = vpop.f32.mrf.mxu0
        %v1562 = vadd.f32 0.0, %v1561
        %1563 = vmatmul.bf16.gmra.mxu0 %v1445
        %v1564 = vpop.f32.mrf.mxu0
        %v1565 = vadd.f32 0.0, %v1564
        %v1566 = vpop.f32.mrf.mxu0
        %v1567 = vadd.f32 0.0, %v1566
        %1568 = vmatmul.bf16.gmra.mxu0 %v1448
        %v1569 = vpop.f32.mrf.mxu0
        %v1570 = vadd.f32 0.0, %v1569
        %v1571 = vpop.f32.mrf.mxu0
        %v1572 = vadd.f32 0.0, %v1571
        %1573 = vmatmul.bf16.gmra.mxu0 %v1451
        %v1574 = vpop.f32.mrf.mxu0
        %v1575 = vadd.f32 0.0, %v1574
        %v1576 = vpop.f32.mrf.mxu0
        %v1577 = vadd.f32 0.0, %v1576
        %1578 = vmatmul.bf16.gmra.mxu0 %v1454
        %v1579 = vpop.f32.mrf.mxu0
        %v1580 = vadd.f32 0.0, %v1579
        %v1581 = vpop.f32.mrf.mxu0
        %v1582 = vadd.f32 0.0, %v1581
        %1583 = vmatmul.bf16.gmra.mxu0 %v1457
        %v1584 = vpop.f32.mrf.mxu0
        %v1585 = vadd.f32 0.0, %v1584
        %v1586 = vpop.f32.mrf.mxu0
        %v1587 = vadd.f32 0.0, %v1586
        %1588 = vmatmul.bf16.gmra.mxu0 %v1460
        %v1589 = vpop.f32.mrf.mxu0
        %v1590 = vadd.f32 0.0, %v1589
        %v1591 = vpop.f32.mrf.mxu0
        %v1592 = vadd.f32 0.0, %v1591
        %1593 = vdwg.mxu0
        %v1594 = vadd.f32 %v1312, %v1475
        %v1595 = vadd.f32 %v1313, %v1477
        %v1596 = vadd.f32 %v1314, %v1480
        %v1597 = vadd.f32 %v1315, %v1482
        %v1598 = vadd.f32 %v1316, %v1485
        %v1599 = vadd.f32 %v1317, %v1487
        %v1600 = vadd.f32 %v1318, %v1490
        %v1601 = vadd.f32 %v1319, %v1492
        %v1602 = vadd.f32 %v1320, %v1495
        %v1603 = vadd.f32 %v1321, %v1497
        %v1604 = vadd.f32 %v1322, %v1500
        %v1605 = vadd.f32 %v1323, %v1502
        %v1606 = vadd.f32 %v1324, %v1505
        %v1607 = vadd.f32 %v1325, %v1507
        %v1608 = vadd.f32 %v1326, %v1510
        %v1609 = vadd.f32 %v1327, %v1512
        %v1610 = vadd.f32 %v1328, %v1515
        %v1611 = vadd.f32 %v1329, %v1517
        %v1612 = vadd.f32 %v1330, %v1520
        %v1613 = vadd.f32 %v1331, %v1522
        %v1614 = vadd.f32 %v1332, %v1525
        %v1615 = vadd.f32 %v1333, %v1527
        %v1616 = vadd.f32 %v1334, %v1530
        %v1617 = vadd.f32 %v1335, %v1532
        %v1618 = vadd.f32 %v1336, %v1535
        %v1619 = vadd.f32 %v1337, %v1537
        %v1620 = vadd.f32 %v1338, %v1540
        %v1621 = vadd.f32 %v1339, %v1542
        %v1622 = vadd.f32 %v1340, %v1545
        %v1623 = vadd.f32 %v1341, %v1547
        %v1624 = vadd.f32 %v1342, %v1550
        %v1625 = vadd.f32 %v1343, %v1552
        %v1626 = vadd.f32 %v1344, %v1555
        %v1627 = vadd.f32 %v1345, %v1557
        %v1628 = vadd.f32 %v1346, %v1560
        %v1629 = vadd.f32 %v1347, %v1562
        %v1630 = vadd.f32 %v1348, %v1565
        %v1631 = vadd.f32 %v1349, %v1567
        %v1632 = vadd.f32 %v1350, %v1570
        %v1633 = vadd.f32 %v1351, %v1572
        %v1634 = vadd.f32 %v1352, %v1575
        %v1635 = vadd.f32 %v1353, %v1577
        %v1636 = vadd.f32 %v1354, %v1580
        %v1637 = vadd.f32 %v1355, %v1582
        %v1638 = vadd.f32 %v1356, %v1585
        %v1639 = vadd.f32 %v1357, %v1587
        %v1640 = vadd.f32 %v1358, %v1590
        %v1641 = vadd.f32 %v1359, %v1592
        %s1642 = scalar_lea.vmem %s1, 16
        %v1643 = vld [vmem:[%s1642] sm:$0xf]
        %v1645 = vunpack.c.l.b16 %v243
        %v1646 = vpack.c.b16 %v1645, %v1645
        %v1647 = vshrl.u32 %v1366, 16
        %v1649 = vshll.u32 %v1366, 16
        %v1651 = vrot.slane %v1649, 1
        %v1652 = vor.u32 %v1647, %v1651
        %v1653 = vshll.u32 %v1367, 16
        %v1655 = vrot.slane %v1653, 1
        %v1656 = vsel %vm631, %v1652, %v1655
        %v1657 = vshrl.u32 %v1367, 16
        %v1659 = vor.u32 %v1657, %v1655
        %v1660 = vshll.u32 %v1368, 16
        %v1662 = vrot.slane %v1660, 1
        %v1663 = vsel %vm631, %v1659, %v1662
        %v1664 = vshrl.u32 %v1368, 16
        %v1666 = vor.u32 %v1664, %v1662
        %v1667 = vshll.u32 %v1369, 16
        %v1669 = vrot.slane %v1667, 1
        %v1670 = vsel %vm631, %v1666, %v1669
        %v1671 = vshrl.u32 %v1369, 16
        %v1673 = vor.u32 %v1671, %v1669
        %v1674 = vshll.u32 %v1370, 16
        %v1676 = vrot.slane %v1674, 1
        %v1677 = vsel %vm631, %v1673, %v1676
        %v1678 = vshrl.u32 %v1370, 16
        %v1680 = vor.u32 %v1678, %v1676
        %v1681 = vshll.u32 %v1371, 16
        %v1683 = vrot.slane %v1681, 1
        %v1684 = vsel %vm631, %v1680, %v1683
        %v1685 = vshrl.u32 %v1371, 16
        %v1687 = vor.u32 %v1685, %v1683
        %v1688 = vshll.u32 %v1372, 16
        %v1690 = vrot.slane %v1688, 1
        %v1691 = vsel %vm631, %v1687, %v1690
        %v1692 = vshrl.u32 %v1372, 16
        %v1694 = vor.u32 %v1692, %v1690
        %v1695 = vshll.u32 %v1373, 16
        %v1697 = vrot.slane %v1695, 1
        %v1698 = vsel %vm631, %v1694, %v1697
        %v1699 = vshrl.u32 %v1373, 16
        %v1701 = vor.u32 %v1699, %v1697
        %v1702 = vshll.u32 %v1374, 16
        %v1704 = vrot.slane %v1702, 1
        %v1705 = vsel %vm631, %v1701, %v1704
        %v1706 = vshrl.u32 %v1374, 16
        %v1708 = vor.u32 %v1706, %v1704
        %v1709 = vshll.u32 %v1375, 16
        %v1711 = vrot.slane %v1709, 1
        %v1712 = vsel %vm631, %v1708, %v1711
        %v1713 = vshrl.u32 %v1375, 16
        %v1715 = vor.u32 %v1713, %v1711
        %v1716 = vshll.u32 %v1376, 16
        %v1718 = vrot.slane %v1716, 1
        %v1719 = vsel %vm631, %v1715, %v1718
        %v1720 = vshrl.u32 %v1376, 16
        %v1722 = vor.u32 %v1720, %v1718
        %v1723 = vshll.u32 %v1377, 16
        %v1725 = vrot.slane %v1723, 1
        %v1726 = vsel %vm631, %v1722, %v1725
        %v1727 = vshrl.u32 %v1377, 16
        %v1729 = vor.u32 %v1727, %v1725
        %v1730 = vshll.u32 %v1378, 16
        %v1732 = vrot.slane %v1730, 1
        %v1733 = vsel %vm631, %v1729, %v1732
        %v1734 = vshrl.u32 %v1378, 16
        %v1736 = vor.u32 %v1734, %v1732
        %v1737 = vshll.u32 %v1379, 16
        %v1739 = vrot.slane %v1737, 1
        %v1740 = vsel %vm631, %v1736, %v1739
        %v1741 = vshrl.u32 %v1379, 16
        %v1743 = vor.u32 %v1741, %v1739
        %v1744 = vshll.u32 %v1380, 16
        %v1746 = vrot.slane %v1744, 1
        %v1747 = vsel %vm631, %v1743, %v1746
        %v1748 = vshrl.u32 %v1380, 16
        %v1750 = vor.u32 %v1748, %v1746
        %v1751 = vshll.u32 %v1381, 16
        %v1753 = vrot.slane %v1751, 1
        %v1754 = vsel %vm631, %v1750, %v1753
        %v1755 = vshrl.u32 %v1381, 16
        %v1757 = vor.u32 %v1755, %v1753
        %v1758 = vshll.u32 %v1382, 16
        %v1760 = vrot.slane %v1758, 1
        %v1761 = vsel %vm631, %v1757, %v1760
        %v1762 = vshrl.u32 %v1382, 16
        %v1764 = vor.u32 %v1762, %v1760
        %v1765 = vshll.u32 %v1383, 16
        %v1767 = vrot.slane %v1765, 1
        %v1768 = vsel %vm631, %v1764, %v1767
        %v1769 = vshrl.u32 %v1383, 16
        %v1771 = vor.u32 %v1769, %v1767
        %v1772 = vshll.u32 %v1384, 16
        %v1774 = vrot.slane %v1772, 1
        %v1775 = vsel %vm631, %v1771, %v1774
        %v1776 = vshrl.u32 %v1384, 16
        %v1778 = vor.u32 %v1776, %v1774
        %v1779 = vshll.u32 %v1385, 16
        %v1781 = vrot.slane %v1779, 1
        %v1782 = vsel %vm631, %v1778, %v1781
        %v1783 = vshrl.u32 %v1385, 16
        %v1785 = vor.u32 %v1783, %v1781
        %v1786 = vshll.u32 %v1386, 16
        %v1788 = vrot.slane %v1786, 1
        %v1789 = vsel %vm631, %v1785, %v1788
        %v1790 = vshrl.u32 %v1386, 16
        %v1792 = vor.u32 %v1790, %v1788
        %v1793 = vshll.u32 %v1387, 16
        %v1795 = vrot.slane %v1793, 1
        %v1796 = vsel %vm631, %v1792, %v1795
        %v1797 = vshrl.u32 %v1387, 16
        %v1799 = vor.u32 %v1797, %v1795
        %v1800 = vshll.u32 %v1388, 16
        %v1802 = vrot.slane %v1800, 1
        %v1803 = vsel %vm631, %v1799, %v1802
        %v1804 = vshrl.u32 %v1388, 16
        %v1806 = vor.u32 %v1804, %v1802
        %v1807 = vshll.u32 %v1389, 16
        %v1809 = vrot.slane %v1807, 1
        %v1810 = vsel %vm631, %v1806, %v1809
        %v1811 = vshrl.u32 %v1389, 16
        %v1813 = vor.u32 %v1811, %v1809
        %v1815 = vshll.u32 %v1646, 16
        %v1817 = vrot.slane %v1815, 1
        %v1818 = vsel %vm631, %v1813, %v1817
        %v1820 = vsel %vm372, %v1656, 0
        %v1823 = vsel %vm372, %v1663, 0
        %v1826 = vsel %vm372, %v1670, 0
        %v1829 = vsel %vm372, %v1677, 0
        %v1832 = vsel %vm372, %v1684, 0
        %v1835 = vsel %vm372, %v1691, 0
        %v1838 = vsel %vm372, %v1698, 0
        %v1841 = vsel %vm372, %v1705, 0
        %v1844 = vsel %vm372, %v1712, 0
        %v1847 = vsel %vm372, %v1719, 0
        %v1850 = vsel %vm372, %v1726, 0
        %v1853 = vsel %vm372, %v1733, 0
        %v1856 = vsel %vm372, %v1740, 0
        %v1859 = vsel %vm372, %v1747, 0
        %v1862 = vsel %vm372, %v1754, 0
        %v1865 = vsel %vm372, %v1761, 0
        %v1868 = vsel %vm372, %v1768, 0
        %v1871 = vsel %vm372, %v1775, 0
        %v1874 = vsel %vm372, %v1782, 0
        %v1877 = vsel %vm372, %v1789, 0
        %v1880 = vsel %vm372, %v1796, 0
        %v1883 = vsel %vm372, %v1803, 0
        %v1886 = vsel %vm372, %v1810, 0
        %v1889 = vsel %vm372, %v1818, 0
        %v1892 = vsel %vm445, %v1643, 0
        %1894 = vmatpush.bf16.msra.mxu0 0
        %1895 = vmatpush.bf16.msra.mxu0 0
        %1896 = vmatpush.bf16.msra.mxu0 0
        %1897 = vmatpush.bf16.msra.mxu0 0
        %1898 = vmatpush.bf16.msra.mxu0 0
        %1899 = vmatpush.bf16.msra.mxu0 0
        %1900 = vmatpush.bf16.msra.mxu0 0
        %1901 = vmatpush.bf16.msra.mxu0 %v1892
        %1902 = vmatmul.bf16.gmra.mxu0 %v1820
        %v1903 = vpop.f32.mrf.mxu0
        %v1904 = vadd.f32 0.0, %v1903
        %v1905 = vpop.f32.mrf.mxu0
        %v1906 = vadd.f32 0.0, %v1905
        %1907 = vmatmul.bf16.gmra.mxu0 %v1823
        %v1908 = vpop.f32.mrf.mxu0
        %v1909 = vadd.f32 0.0, %v1908
        %v1910 = vpop.f32.mrf.mxu0
        %v1911 = vadd.f32 0.0, %v1910
        %1912 = vmatmul.bf16.gmra.mxu0 %v1826
        %v1913 = vpop.f32.mrf.mxu0
        %v1914 = vadd.f32 0.0, %v1913
        %v1915 = vpop.f32.mrf.mxu0
        %v1916 = vadd.f32 0.0, %v1915
        %1917 = vmatmul.bf16.gmra.mxu0 %v1829
        %v1918 = vpop.f32.mrf.mxu0
        %v1919 = vadd.f32 0.0, %v1918
        %v1920 = vpop.f32.mrf.mxu0
        %v1921 = vadd.f32 0.0, %v1920
        %1922 = vmatmul.bf16.gmra.mxu0 %v1832
        %v1923 = vpop.f32.mrf.mxu0
        %v1924 = vadd.f32 0.0, %v1923
        %v1925 = vpop.f32.mrf.mxu0
        %v1926 = vadd.f32 0.0, %v1925
        %1927 = vmatmul.bf16.gmra.mxu0 %v1835
        %v1928 = vpop.f32.mrf.mxu0
        %v1929 = vadd.f32 0.0, %v1928
        %v1930 = vpop.f32.mrf.mxu0
        %v1931 = vadd.f32 0.0, %v1930
        %1932 = vmatmul.bf16.gmra.mxu0 %v1838
        %v1933 = vpop.f32.mrf.mxu0
        %v1934 = vadd.f32 0.0, %v1933
        %v1935 = vpop.f32.mrf.mxu0
        %v1936 = vadd.f32 0.0, %v1935
        %1937 = vmatmul.bf16.gmra.mxu0 %v1841
        %v1938 = vpop.f32.mrf.mxu0
        %v1939 = vadd.f32 0.0, %v1938
        %v1940 = vpop.f32.mrf.mxu0
        %v1941 = vadd.f32 0.0, %v1940
        %1942 = vmatmul.bf16.gmra.mxu0 %v1844
        %v1943 = vpop.f32.mrf.mxu0
        %v1944 = vadd.f32 0.0, %v1943
        %v1945 = vpop.f32.mrf.mxu0
        %v1946 = vadd.f32 0.0, %v1945
        %1947 = vmatmul.bf16.gmra.mxu0 %v1847
        %v1948 = vpop.f32.mrf.mxu0
        %v1949 = vadd.f32 0.0, %v1948
        %v1950 = vpop.f32.mrf.mxu0
        %v1951 = vadd.f32 0.0, %v1950
        %1952 = vmatmul.bf16.gmra.mxu0 %v1850
        %v1953 = vpop.f32.mrf.mxu0
        %v1954 = vadd.f32 0.0, %v1953
        %v1955 = vpop.f32.mrf.mxu0
        %v1956 = vadd.f32 0.0, %v1955
        %1957 = vmatmul.bf16.gmra.mxu0 %v1853
        %v1958 = vpop.f32.mrf.mxu0
        %v1959 = vadd.f32 0.0, %v1958
        %v1960 = vpop.f32.mrf.mxu0
        %v1961 = vadd.f32 0.0, %v1960
        %1962 = vmatmul.bf16.gmra.mxu0 %v1856
        %v1963 = vpop.f32.mrf.mxu0
        %v1964 = vadd.f32 0.0, %v1963
        %v1965 = vpop.f32.mrf.mxu0
        %v1966 = vadd.f32 0.0, %v1965
        %1967 = vmatmul.bf16.gmra.mxu0 %v1859
        %v1968 = vpop.f32.mrf.mxu0
        %v1969 = vadd.f32 0.0, %v1968
        %v1970 = vpop.f32.mrf.mxu0
        %v1971 = vadd.f32 0.0, %v1970
        %1972 = vmatmul.bf16.gmra.mxu0 %v1862
        %v1973 = vpop.f32.mrf.mxu0
        %v1974 = vadd.f32 0.0, %v1973
        %v1975 = vpop.f32.mrf.mxu0
        %v1976 = vadd.f32 0.0, %v1975
        %1977 = vmatmul.bf16.gmra.mxu0 %v1865
        %v1978 = vpop.f32.mrf.mxu0
        %v1979 = vadd.f32 0.0, %v1978
        %v1980 = vpop.f32.mrf.mxu0
        %v1981 = vadd.f32 0.0, %v1980
        %1982 = vmatmul.bf16.gmra.mxu0 %v1868
        %v1983 = vpop.f32.mrf.mxu0
        %v1984 = vadd.f32 0.0, %v1983
        %v1985 = vpop.f32.mrf.mxu0
        %v1986 = vadd.f32 0.0, %v1985
        %1987 = vmatmul.bf16.gmra.mxu0 %v1871
        %v1988 = vpop.f32.mrf.mxu0
        %v1989 = vadd.f32 0.0, %v1988
        %v1990 = vpop.f32.mrf.mxu0
        %v1991 = vadd.f32 0.0, %v1990
        %1992 = vmatmul.bf16.gmra.mxu0 %v1874
        %v1993 = vpop.f32.mrf.mxu0
        %v1994 = vadd.f32 0.0, %v1993
        %v1995 = vpop.f32.mrf.mxu0
        %v1996 = vadd.f32 0.0, %v1995
        %1997 = vmatmul.bf16.gmra.mxu0 %v1877
        %v1998 = vpop.f32.mrf.mxu0
        %v1999 = vadd.f32 0.0, %v1998
        %v2000 = vpop.f32.mrf.mxu0
        %v2001 = vadd.f32 0.0, %v2000
        %2002 = vmatmul.bf16.gmra.mxu0 %v1880
        %v2003 = vpop.f32.mrf.mxu0
        %v2004 = vadd.f32 0.0, %v2003
        %v2005 = vpop.f32.mrf.mxu0
        %v2006 = vadd.f32 0.0, %v2005
        %2007 = vmatmul.bf16.gmra.mxu0 %v1883
        %v2008 = vpop.f32.mrf.mxu0
        %v2009 = vadd.f32 0.0, %v2008
        %v2010 = vpop.f32.mrf.mxu0
        %v2011 = vadd.f32 0.0, %v2010
        %2012 = vmatmul.bf16.gmra.mxu0 %v1886
        %v2013 = vpop.f32.mrf.mxu0
        %v2014 = vadd.f32 0.0, %v2013
        %v2015 = vpop.f32.mrf.mxu0
        %v2016 = vadd.f32 0.0, %v2015
        %2017 = vmatmul.bf16.gmra.mxu0 %v1889
        %v2018 = vpop.f32.mrf.mxu0
        %v2019 = vadd.f32 0.0, %v2018
        %v2020 = vpop.f32.mrf.mxu0
        %v2021 = vadd.f32 0.0, %v2020
        %2022 = vdwg.mxu0
        %v2023 = vadd.f32 %v1594, %v1904
        %v2024 = vadd.f32 %v1595, %v1906
        %v2025 = vadd.f32 %v1596, %v1909
        %v2026 = vadd.f32 %v1597, %v1911
        %v2027 = vadd.f32 %v1598, %v1914
        %v2028 = vadd.f32 %v1599, %v1916
        %v2029 = vadd.f32 %v1600, %v1919
        %v2030 = vadd.f32 %v1601, %v1921
        %v2031 = vadd.f32 %v1602, %v1924
        %v2032 = vadd.f32 %v1603, %v1926
        %v2033 = vadd.f32 %v1604, %v1929
        %v2034 = vadd.f32 %v1605, %v1931
        %v2035 = vadd.f32 %v1606, %v1934
        %v2036 = vadd.f32 %v1607, %v1936
        %v2037 = vadd.f32 %v1608, %v1939
        %v2038 = vadd.f32 %v1609, %v1941
        %v2039 = vadd.f32 %v1610, %v1944
        %v2040 = vadd.f32 %v1611, %v1946
        %v2041 = vadd.f32 %v1612, %v1949
        %v2042 = vadd.f32 %v1613, %v1951
        %v2043 = vadd.f32 %v1614, %v1954
        %v2044 = vadd.f32 %v1615, %v1956
        %v2045 = vadd.f32 %v1616, %v1959
        %v2046 = vadd.f32 %v1617, %v1961
        %v2047 = vadd.f32 %v1618, %v1964
        %v2048 = vadd.f32 %v1619, %v1966
        %v2049 = vadd.f32 %v1620, %v1969
        %v2050 = vadd.f32 %v1621, %v1971
        %v2051 = vadd.f32 %v1622, %v1974
        %v2052 = vadd.f32 %v1623, %v1976
        %v2053 = vadd.f32 %v1624, %v1979
        %v2054 = vadd.f32 %v1625, %v1981
        %v2055 = vadd.f32 %v1626, %v1984
        %v2056 = vadd.f32 %v1627, %v1986
        %v2057 = vadd.f32 %v1628, %v1989
        %v2058 = vadd.f32 %v1629, %v1991
        %v2059 = vadd.f32 %v1630, %v1994
        %v2060 = vadd.f32 %v1631, %v1996
        %v2061 = vadd.f32 %v1632, %v1999
        %v2062 = vadd.f32 %v1633, %v2001
        %v2063 = vadd.f32 %v1634, %v2004
        %v2064 = vadd.f32 %v1635, %v2006
        %v2065 = vadd.f32 %v1636, %v2009
        %v2066 = vadd.f32 %v1637, %v2011
        %v2067 = vadd.f32 %v1638, %v2014
        %v2068 = vadd.f32 %v1639, %v2016
        %v2069 = vadd.f32 %v1640, %v2019
        %v2070 = vadd.f32 %v1641, %v2021
        %s2071 = scalar_lea.vmem %s1, 20
        %v2072 = vld [vmem:[%s2071] sm:$0xf]
        %v2073 = vrot.slane %v1366, 1
        %v2074 = vrot.slane %v1367, 1
        %v2075 = vsel %vm1058, %v2073, %v2074
        %v2076 = vrot.slane %v1368, 1
        %v2077 = vsel %vm1058, %v2074, %v2076
        %v2078 = vrot.slane %v1369, 1
        %v2079 = vsel %vm1058, %v2076, %v2078
        %v2080 = vrot.slane %v1370, 1
        %v2081 = vsel %vm1058, %v2078, %v2080
        %v2082 = vrot.slane %v1371, 1
        %v2083 = vsel %vm1058, %v2080, %v2082
        %v2084 = vrot.slane %v1372, 1
        %v2085 = vsel %vm1058, %v2082, %v2084
        %v2086 = vrot.slane %v1373, 1
        %v2087 = vsel %vm1058, %v2084, %v2086
        %v2088 = vrot.slane %v1374, 1
        %v2089 = vsel %vm1058, %v2086, %v2088
        %v2090 = vrot.slane %v1375, 1
        %v2091 = vsel %vm1058, %v2088, %v2090
        %v2092 = vrot.slane %v1376, 1
        %v2093 = vsel %vm1058, %v2090, %v2092
        %v2094 = vrot.slane %v1377, 1
        %v2095 = vsel %vm1058, %v2092, %v2094
        %v2096 = vrot.slane %v1378, 1
        %v2097 = vsel %vm1058, %v2094, %v2096
        %v2098 = vrot.slane %v1379, 1
        %v2099 = vsel %vm1058, %v2096, %v2098
        %v2100 = vrot.slane %v1380, 1
        %v2101 = vsel %vm1058, %v2098, %v2100
        %v2102 = vrot.slane %v1381, 1
        %v2103 = vsel %vm1058, %v2100, %v2102
        %v2104 = vrot.slane %v1382, 1
        %v2105 = vsel %vm1058, %v2102, %v2104
        %v2106 = vrot.slane %v1383, 1
        %v2107 = vsel %vm1058, %v2104, %v2106
        %v2108 = vrot.slane %v1384, 1
        %v2109 = vsel %vm1058, %v2106, %v2108
        %v2110 = vrot.slane %v1385, 1
        %v2111 = vsel %vm1058, %v2108, %v2110
        %v2112 = vrot.slane %v1386, 1
        %v2113 = vsel %vm1058, %v2110, %v2112
        %v2114 = vrot.slane %v1387, 1
        %v2115 = vsel %vm1058, %v2112, %v2114
        %v2116 = vrot.slane %v1388, 1
        %v2117 = vsel %vm1058, %v2114, %v2116
        %v2118 = vrot.slane %v1389, 1
        %v2119 = vsel %vm1058, %v2116, %v2118
        %v2120 = vrot.slane %v1646, 1
        %v2121 = vsel %vm1058, %v2118, %v2120
        %v2123 = vsel %vm372, %v2075, 0
        %v2126 = vsel %vm372, %v2077, 0
        %v2129 = vsel %vm372, %v2079, 0
        %v2132 = vsel %vm372, %v2081, 0
        %v2135 = vsel %vm372, %v2083, 0
        %v2138 = vsel %vm372, %v2085, 0
        %v2141 = vsel %vm372, %v2087, 0
        %v2144 = vsel %vm372, %v2089, 0
        %v2147 = vsel %vm372, %v2091, 0
        %v2150 = vsel %vm372, %v2093, 0
        %v2153 = vsel %vm372, %v2095, 0
        %v2156 = vsel %vm372, %v2097, 0
        %v2159 = vsel %vm372, %v2099, 0
        %v2162 = vsel %vm372, %v2101, 0
        %v2165 = vsel %vm372, %v2103, 0
        %v2168 = vsel %vm372, %v2105, 0
        %v2171 = vsel %vm372, %v2107, 0
        %v2174 = vsel %vm372, %v2109, 0
        %v2177 = vsel %vm372, %v2111, 0
        %v2180 = vsel %vm372, %v2113, 0
        %v2183 = vsel %vm372, %v2115, 0
        %v2186 = vsel %vm372, %v2117, 0
        %v2189 = vsel %vm372, %v2119, 0
        %v2192 = vsel %vm372, %v2121, 0
        %v2195 = vsel %vm445, %v2072, 0
        %2197 = vmatpush.bf16.msra.mxu0 0
        %2198 = vmatpush.bf16.msra.mxu0 0
        %2199 = vmatpush.bf16.msra.mxu0 0
        %2200 = vmatpush.bf16.msra.mxu0 0
        %2201 = vmatpush.bf16.msra.mxu0 0
        %2202 = vmatpush.bf16.msra.mxu0 0
        %2203 = vmatpush.bf16.msra.mxu0 0
        %2204 = vmatpush.bf16.msra.mxu0 %v2195
        %2205 = vmatmul.bf16.gmra.mxu0 %v2123
        %v2206 = vpop.f32.mrf.mxu0
        %v2207 = vadd.f32 0.0, %v2206
        %v2208 = vpop.f32.mrf.mxu0
        %v2209 = vadd.f32 0.0, %v2208
        %2210 = vmatmul.bf16.gmra.mxu0 %v2126
        %v2211 = vpop.f32.mrf.mxu0
        %v2212 = vadd.f32 0.0, %v2211
        %v2213 = vpop.f32.mrf.mxu0
        %v2214 = vadd.f32 0.0, %v2213
        %2215 = vmatmul.bf16.gmra.mxu0 %v2129
        %v2216 = vpop.f32.mrf.mxu0
        %v2217 = vadd.f32 0.0, %v2216
        %v2218 = vpop.f32.mrf.mxu0
        %v2219 = vadd.f32 0.0, %v2218
        %2220 = vmatmul.bf16.gmra.mxu0 %v2132
        %v2221 = vpop.f32.mrf.mxu0
        %v2222 = vadd.f32 0.0, %v2221
        %v2223 = vpop.f32.mrf.mxu0
        %v2224 = vadd.f32 0.0, %v2223
        %2225 = vmatmul.bf16.gmra.mxu0 %v2135
        %v2226 = vpop.f32.mrf.mxu0
        %v2227 = vadd.f32 0.0, %v2226
        %v2228 = vpop.f32.mrf.mxu0
        %v2229 = vadd.f32 0.0, %v2228
        %2230 = vmatmul.bf16.gmra.mxu0 %v2138
        %v2231 = vpop.f32.mrf.mxu0
        %v2232 = vadd.f32 0.0, %v2231
        %v2233 = vpop.f32.mrf.mxu0
        %v2234 = vadd.f32 0.0, %v2233
        %2235 = vmatmul.bf16.gmra.mxu0 %v2141
        %v2236 = vpop.f32.mrf.mxu0
        %v2237 = vadd.f32 0.0, %v2236
        %v2238 = vpop.f32.mrf.mxu0
        %v2239 = vadd.f32 0.0, %v2238
        %2240 = vmatmul.bf16.gmra.mxu0 %v2144
        %v2241 = vpop.f32.mrf.mxu0
        %v2242 = vadd.f32 0.0, %v2241
        %v2243 = vpop.f32.mrf.mxu0
        %v2244 = vadd.f32 0.0, %v2243
        %2245 = vmatmul.bf16.gmra.mxu0 %v2147
        %v2246 = vpop.f32.mrf.mxu0
        %v2247 = vadd.f32 0.0, %v2246
        %v2248 = vpop.f32.mrf.mxu0
        %v2249 = vadd.f32 0.0, %v2248
        %2250 = vmatmul.bf16.gmra.mxu0 %v2150
        %v2251 = vpop.f32.mrf.mxu0
        %v2252 = vadd.f32 0.0, %v2251
        %v2253 = vpop.f32.mrf.mxu0
        %v2254 = vadd.f32 0.0, %v2253
        %2255 = vmatmul.bf16.gmra.mxu0 %v2153
        %v2256 = vpop.f32.mrf.mxu0
        %v2257 = vadd.f32 0.0, %v2256
        %v2258 = vpop.f32.mrf.mxu0
        %v2259 = vadd.f32 0.0, %v2258
        %2260 = vmatmul.bf16.gmra.mxu0 %v2156
        %v2261 = vpop.f32.mrf.mxu0
        %v2262 = vadd.f32 0.0, %v2261
        %v2263 = vpop.f32.mrf.mxu0
        %v2264 = vadd.f32 0.0, %v2263
        %2265 = vmatmul.bf16.gmra.mxu0 %v2159
        %v2266 = vpop.f32.mrf.mxu0
        %v2267 = vadd.f32 0.0, %v2266
        %v2268 = vpop.f32.mrf.mxu0
        %v2269 = vadd.f32 0.0, %v2268
        %2270 = vmatmul.bf16.gmra.mxu0 %v2162
        %v2271 = vpop.f32.mrf.mxu0
        %v2272 = vadd.f32 0.0, %v2271
        %v2273 = vpop.f32.mrf.mxu0
        %v2274 = vadd.f32 0.0, %v2273
        %2275 = vmatmul.bf16.gmra.mxu0 %v2165
        %v2276 = vpop.f32.mrf.mxu0
        %v2277 = vadd.f32 0.0, %v2276
        %v2278 = vpop.f32.mrf.mxu0
        %v2279 = vadd.f32 0.0, %v2278
        %2280 = vmatmul.bf16.gmra.mxu0 %v2168
        %v2281 = vpop.f32.mrf.mxu0
        %v2282 = vadd.f32 0.0, %v2281
        %v2283 = vpop.f32.mrf.mxu0
        %v2284 = vadd.f32 0.0, %v2283
        %2285 = vmatmul.bf16.gmra.mxu0 %v2171
        %v2286 = vpop.f32.mrf.mxu0
        %v2287 = vadd.f32 0.0, %v2286
        %v2288 = vpop.f32.mrf.mxu0
        %v2289 = vadd.f32 0.0, %v2288
        %2290 = vmatmul.bf16.gmra.mxu0 %v2174
        %v2291 = vpop.f32.mrf.mxu0
        %v2292 = vadd.f32 0.0, %v2291
        %v2293 = vpop.f32.mrf.mxu0
        %v2294 = vadd.f32 0.0, %v2293
        %2295 = vmatmul.bf16.gmra.mxu0 %v2177
        %v2296 = vpop.f32.mrf.mxu0
        %v2297 = vadd.f32 0.0, %v2296
        %v2298 = vpop.f32.mrf.mxu0
        %v2299 = vadd.f32 0.0, %v2298
        %2300 = vmatmul.bf16.gmra.mxu0 %v2180
        %v2301 = vpop.f32.mrf.mxu0
        %v2302 = vadd.f32 0.0, %v2301
        %v2303 = vpop.f32.mrf.mxu0
        %v2304 = vadd.f32 0.0, %v2303
        %2305 = vmatmul.bf16.gmra.mxu0 %v2183
        %v2306 = vpop.f32.mrf.mxu0
        %v2307 = vadd.f32 0.0, %v2306
        %v2308 = vpop.f32.mrf.mxu0
        %v2309 = vadd.f32 0.0, %v2308
        %2310 = vmatmul.bf16.gmra.mxu0 %v2186
        %v2311 = vpop.f32.mrf.mxu0
        %v2312 = vadd.f32 0.0, %v2311
        %v2313 = vpop.f32.mrf.mxu0
        %v2314 = vadd.f32 0.0, %v2313
        %2315 = vmatmul.bf16.gmra.mxu0 %v2189
        %v2316 = vpop.f32.mrf.mxu0
        %v2317 = vadd.f32 0.0, %v2316
        %v2318 = vpop.f32.mrf.mxu0
        %v2319 = vadd.f32 0.0, %v2318
        %2320 = vmatmul.bf16.gmra.mxu0 %v2192
        %v2321 = vpop.f32.mrf.mxu0
        %v2322 = vadd.f32 0.0, %v2321
        %v2323 = vpop.f32.mrf.mxu0
        %v2324 = vadd.f32 0.0, %v2323
        %2325 = vdwg.mxu0
        %v2326 = vadd.f32 %v2023, %v2207
        %v2327 = vadd.f32 %v2024, %v2209
        %v2328 = vadd.f32 %v2025, %v2212
        %v2329 = vadd.f32 %v2026, %v2214
        %v2330 = vadd.f32 %v2027, %v2217
        %v2331 = vadd.f32 %v2028, %v2219
        %v2332 = vadd.f32 %v2029, %v2222
        %v2333 = vadd.f32 %v2030, %v2224
        %v2334 = vadd.f32 %v2031, %v2227
        %v2335 = vadd.f32 %v2032, %v2229
        %v2336 = vadd.f32 %v2033, %v2232
        %v2337 = vadd.f32 %v2034, %v2234
        %v2338 = vadd.f32 %v2035, %v2237
        %v2339 = vadd.f32 %v2036, %v2239
        %v2340 = vadd.f32 %v2037, %v2242
        %v2341 = vadd.f32 %v2038, %v2244
        %v2342 = vadd.f32 %v2039, %v2247
        %v2343 = vadd.f32 %v2040, %v2249
        %v2344 = vadd.f32 %v2041, %v2252
        %v2345 = vadd.f32 %v2042, %v2254
        %v2346 = vadd.f32 %v2043, %v2257
        %v2347 = vadd.f32 %v2044, %v2259
        %v2348 = vadd.f32 %v2045, %v2262
        %v2349 = vadd.f32 %v2046, %v2264
        %v2350 = vadd.f32 %v2047, %v2267
        %v2351 = vadd.f32 %v2048, %v2269
        %v2352 = vadd.f32 %v2049, %v2272
        %v2353 = vadd.f32 %v2050, %v2274
        %v2354 = vadd.f32 %v2051, %v2277
        %v2355 = vadd.f32 %v2052, %v2279
        %v2356 = vadd.f32 %v2053, %v2282
        %v2357 = vadd.f32 %v2054, %v2284
        %v2358 = vadd.f32 %v2055, %v2287
        %v2359 = vadd.f32 %v2056, %v2289
        %v2360 = vadd.f32 %v2057, %v2292
        %v2361 = vadd.f32 %v2058, %v2294
        %v2362 = vadd.f32 %v2059, %v2297
        %v2363 = vadd.f32 %v2060, %v2299
        %v2364 = vadd.f32 %v2061, %v2302
        %v2365 = vadd.f32 %v2062, %v2304
        %v2366 = vadd.f32 %v2063, %v2307
        %v2367 = vadd.f32 %v2064, %v2309
        %v2368 = vadd.f32 %v2065, %v2312
        %v2369 = vadd.f32 %v2066, %v2314
        %v2370 = vadd.f32 %v2067, %v2317
        %v2371 = vadd.f32 %v2068, %v2319
        %v2372 = vadd.f32 %v2069, %v2322
        %v2373 = vadd.f32 %v2070, %v2324
        %s2374 = scalar_lea.vmem %s1, 24
        %v2375 = vld [vmem:[%s2374] sm:$0xf]
        %v2378 = vunpack.c.l.b16 %v244
        %v2379 = vunpack.c.l.b16 %v245
        %v2380 = vpack.c.b16 %v1364, %v629
        %v2381 = vpack.c.b16 %v1645, %v1365
        %v2382 = vpack.c.b16 %v2379, %v2378
        %v2384 = vsel %vm372, %v2380, 0
        %v2387 = vsel %vm372, %v2381, 0
        %v2390 = vsel %vm372, %v2382, 0
        %v2393 = vsel %vm445, %v2375, 0
        %2395 = vmatpush.bf16.msra.mxu0 0
        %2396 = vmatpush.bf16.msra.mxu0 0
        %2397 = vmatpush.bf16.msra.mxu0 0
        %2398 = vmatpush.bf16.msra.mxu0 0
        %2399 = vmatpush.bf16.msra.mxu0 0
        %2400 = vmatpush.bf16.msra.mxu0 0
        %2401 = vmatpush.bf16.msra.mxu0 0
        %2402 = vmatpush.bf16.msra.mxu0 %v2393
        %2403 = vmatmul.bf16.gmra.mxu0 %v383
        %v2404 = vpop.f32.mrf.mxu0
        %v2405 = vadd.f32 0.0, %v2404
        %v2406 = vpop.f32.mrf.mxu0
        %v2407 = vadd.f32 0.0, %v2406
        %2408 = vmatmul.bf16.gmra.mxu0 %v386
        %v2409 = vpop.f32.mrf.mxu0
        %v2410 = vadd.f32 0.0, %v2409
        %v2411 = vpop.f32.mrf.mxu0
        %v2412 = vadd.f32 0.0, %v2411
        %2413 = vmatmul.bf16.gmra.mxu0 %v389
        %v2414 = vpop.f32.mrf.mxu0
        %v2415 = vadd.f32 0.0, %v2414
        %v2416 = vpop.f32.mrf.mxu0
        %v2417 = vadd.f32 0.0, %v2416
        %2418 = vmatmul.bf16.gmra.mxu0 %v392
        %v2419 = vpop.f32.mrf.mxu0
        %v2420 = vadd.f32 0.0, %v2419
        %v2421 = vpop.f32.mrf.mxu0
        %v2422 = vadd.f32 0.0, %v2421
        %2423 = vmatmul.bf16.gmra.mxu0 %v395
        %v2424 = vpop.f32.mrf.mxu0
        %v2425 = vadd.f32 0.0, %v2424
        %v2426 = vpop.f32.mrf.mxu0
        %v2427 = vadd.f32 0.0, %v2426
        %2428 = vmatmul.bf16.gmra.mxu0 %v398
        %v2429 = vpop.f32.mrf.mxu0
        %v2430 = vadd.f32 0.0, %v2429
        %v2431 = vpop.f32.mrf.mxu0
        %v2432 = vadd.f32 0.0, %v2431
        %2433 = vmatmul.bf16.gmra.mxu0 %v401
        %v2434 = vpop.f32.mrf.mxu0
        %v2435 = vadd.f32 0.0, %v2434
        %v2436 = vpop.f32.mrf.mxu0
        %v2437 = vadd.f32 0.0, %v2436
        %2438 = vmatmul.bf16.gmra.mxu0 %v404
        %v2439 = vpop.f32.mrf.mxu0
        %v2440 = vadd.f32 0.0, %v2439
        %v2441 = vpop.f32.mrf.mxu0
        %v2442 = vadd.f32 0.0, %v2441
        %2443 = vmatmul.bf16.gmra.mxu0 %v407
        %v2444 = vpop.f32.mrf.mxu0
        %v2445 = vadd.f32 0.0, %v2444
        %v2446 = vpop.f32.mrf.mxu0
        %v2447 = vadd.f32 0.0, %v2446
        %2448 = vmatmul.bf16.gmra.mxu0 %v410
        %v2449 = vpop.f32.mrf.mxu0
        %v2450 = vadd.f32 0.0, %v2449
        %v2451 = vpop.f32.mrf.mxu0
        %v2452 = vadd.f32 0.0, %v2451
        %2453 = vmatmul.bf16.gmra.mxu0 %v413
        %v2454 = vpop.f32.mrf.mxu0
        %v2455 = vadd.f32 0.0, %v2454
        %v2456 = vpop.f32.mrf.mxu0
        %v2457 = vadd.f32 0.0, %v2456
        %2458 = vmatmul.bf16.gmra.mxu0 %v416
        %v2459 = vpop.f32.mrf.mxu0
        %v2460 = vadd.f32 0.0, %v2459
        %v2461 = vpop.f32.mrf.mxu0
        %v2462 = vadd.f32 0.0, %v2461
        %2463 = vmatmul.bf16.gmra.mxu0 %v419
        %v2464 = vpop.f32.mrf.mxu0
        %v2465 = vadd.f32 0.0, %v2464
        %v2466 = vpop.f32.mrf.mxu0
        %v2467 = vadd.f32 0.0, %v2466
        %2468 = vmatmul.bf16.gmra.mxu0 %v422
        %v2469 = vpop.f32.mrf.mxu0
        %v2470 = vadd.f32 0.0, %v2469
        %v2471 = vpop.f32.mrf.mxu0
        %v2472 = vadd.f32 0.0, %v2471
        %2473 = vmatmul.bf16.gmra.mxu0 %v425
        %v2474 = vpop.f32.mrf.mxu0
        %v2475 = vadd.f32 0.0, %v2474
        %v2476 = vpop.f32.mrf.mxu0
        %v2477 = vadd.f32 0.0, %v2476
        %2478 = vmatmul.bf16.gmra.mxu0 %v428
        %v2479 = vpop.f32.mrf.mxu0
        %v2480 = vadd.f32 0.0, %v2479
        %v2481 = vpop.f32.mrf.mxu0
        %v2482 = vadd.f32 0.0, %v2481
        %2483 = vmatmul.bf16.gmra.mxu0 %v431
        %v2484 = vpop.f32.mrf.mxu0
        %v2485 = vadd.f32 0.0, %v2484
        %v2486 = vpop.f32.mrf.mxu0
        %v2487 = vadd.f32 0.0, %v2486
        %2488 = vmatmul.bf16.gmra.mxu0 %v434
        %v2489 = vpop.f32.mrf.mxu0
        %v2490 = vadd.f32 0.0, %v2489
        %v2491 = vpop.f32.mrf.mxu0
        %v2492 = vadd.f32 0.0, %v2491
        %2493 = vmatmul.bf16.gmra.mxu0 %v437
        %v2494 = vpop.f32.mrf.mxu0
        %v2495 = vadd.f32 0.0, %v2494
        %v2496 = vpop.f32.mrf.mxu0
        %v2497 = vadd.f32 0.0, %v2496
        %2498 = vmatmul.bf16.gmra.mxu0 %v440
        %v2499 = vpop.f32.mrf.mxu0
        %v2500 = vadd.f32 0.0, %v2499
        %v2501 = vpop.f32.mrf.mxu0
        %v2502 = vadd.f32 0.0, %v2501
        %2503 = vmatmul.bf16.gmra.mxu0 %v443
        %v2504 = vpop.f32.mrf.mxu0
        %v2505 = vadd.f32 0.0, %v2504
        %v2506 = vpop.f32.mrf.mxu0
        %v2507 = vadd.f32 0.0, %v2506
        %2508 = vmatmul.bf16.gmra.mxu0 %v2384
        %v2509 = vpop.f32.mrf.mxu0
        %v2510 = vadd.f32 0.0, %v2509
        %v2511 = vpop.f32.mrf.mxu0
        %v2512 = vadd.f32 0.0, %v2511
        %2513 = vmatmul.bf16.gmra.mxu0 %v2387
        %v2514 = vpop.f32.mrf.mxu0
        %v2515 = vadd.f32 0.0, %v2514
        %v2516 = vpop.f32.mrf.mxu0
        %v2517 = vadd.f32 0.0, %v2516
        %2518 = vmatmul.bf16.gmra.mxu0 %v2390
        %v2519 = vpop.f32.mrf.mxu0
        %v2520 = vadd.f32 0.0, %v2519
        %v2521 = vpop.f32.mrf.mxu0
        %v2522 = vadd.f32 0.0, %v2521
        %2523 = vdwg.mxu0
        %v2524 = vadd.f32 %v2326, %v2405
        %v2525 = vadd.f32 %v2327, %v2407
        %v2526 = vadd.f32 %v2328, %v2410
        %v2527 = vadd.f32 %v2329, %v2412
        %v2528 = vadd.f32 %v2330, %v2415
        %v2529 = vadd.f32 %v2331, %v2417
        %v2530 = vadd.f32 %v2332, %v2420
        %v2531 = vadd.f32 %v2333, %v2422
        %v2532 = vadd.f32 %v2334, %v2425
        %v2533 = vadd.f32 %v2335, %v2427
        %v2534 = vadd.f32 %v2336, %v2430
        %v2535 = vadd.f32 %v2337, %v2432
        %v2536 = vadd.f32 %v2338, %v2435
        %v2537 = vadd.f32 %v2339, %v2437
        %v2538 = vadd.f32 %v2340, %v2440
        %v2539 = vadd.f32 %v2341, %v2442
        %v2540 = vadd.f32 %v2342, %v2445
        %v2541 = vadd.f32 %v2343, %v2447
        %v2542 = vadd.f32 %v2344, %v2450
        %v2543 = vadd.f32 %v2345, %v2452
        %v2544 = vadd.f32 %v2346, %v2455
        %v2545 = vadd.f32 %v2347, %v2457
        %v2546 = vadd.f32 %v2348, %v2460
        %v2547 = vadd.f32 %v2349, %v2462
        %v2548 = vadd.f32 %v2350, %v2465
        %v2549 = vadd.f32 %v2351, %v2467
        %v2550 = vadd.f32 %v2352, %v2470
        %v2551 = vadd.f32 %v2353, %v2472
        %v2552 = vadd.f32 %v2354, %v2475
        %v2553 = vadd.f32 %v2355, %v2477
        %v2554 = vadd.f32 %v2356, %v2480
        %v2555 = vadd.f32 %v2357, %v2482
        %v2556 = vadd.f32 %v2358, %v2485
        %v2557 = vadd.f32 %v2359, %v2487
        %v2558 = vadd.f32 %v2360, %v2490
        %v2559 = vadd.f32 %v2361, %v2492
        %v2560 = vadd.f32 %v2362, %v2495
        %v2561 = vadd.f32 %v2363, %v2497
        %v2562 = vadd.f32 %v2364, %v2500
        %v2563 = vadd.f32 %v2365, %v2502
        %v2564 = vadd.f32 %v2366, %v2505
        %v2565 = vadd.f32 %v2367, %v2507
        %v2566 = vadd.f32 %v2368, %v2510
        %v2567 = vadd.f32 %v2369, %v2512
        %v2568 = vadd.f32 %v2370, %v2515
        %v2569 = vadd.f32 %v2371, %v2517
        %v2570 = vadd.f32 %v2372, %v2520
        %v2571 = vadd.f32 %v2373, %v2522
        %s2572 = scalar_lea.vmem %s1, 28
        %v2573 = vld [vmem:[%s2572] sm:$0xf]
        %v2575 = vunpack.c.l.b16 %v246
        %v2576 = vpack.c.b16 %v2575, %v2575
        %v2577 = vshll.u32 %v2380, 16
        %v2579 = vrot.slane %v2577, 1
        %v2580 = vsel %vm631, %v798, %v2579
        %v2581 = vshrl.u32 %v2380, 16
        %v2583 = vor.u32 %v2581, %v2579
        %v2584 = vshll.u32 %v2381, 16
        %v2586 = vrot.slane %v2584, 1
        %v2587 = vsel %vm631, %v2583, %v2586
        %v2588 = vshrl.u32 %v2381, 16
        %v2590 = vor.u32 %v2588, %v2586
        %v2591 = vshll.u32 %v2382, 16
        %v2593 = vrot.slane %v2591, 1
        %v2594 = vsel %vm631, %v2590, %v2593
        %v2595 = vshrl.u32 %v2382, 16
        %v2597 = vor.u32 %v2595, %v2593
        %v2599 = vshll.u32 %v2576, 16
        %v2601 = vrot.slane %v2599, 1
        %v2602 = vsel %vm631, %v2597, %v2601
        %v2604 = vsel %vm372, %v2580, 0
        %v2607 = vsel %vm372, %v2587, 0
        %v2610 = vsel %vm372, %v2594, 0
        %v2613 = vsel %vm372, %v2602, 0
        %v2616 = vsel %vm445, %v2573, 0
        %2618 = vmatpush.bf16.msra.mxu0 0
        %2619 = vmatpush.bf16.msra.mxu0 0
        %2620 = vmatpush.bf16.msra.mxu0 0
        %2621 = vmatpush.bf16.msra.mxu0 0
        %2622 = vmatpush.bf16.msra.mxu0 0
        %2623 = vmatpush.bf16.msra.mxu0 0
        %2624 = vmatpush.bf16.msra.mxu0 0
        %2625 = vmatpush.bf16.msra.mxu0 %v2616
        %2626 = vmatmul.bf16.gmra.mxu0 %v814
        %v2627 = vpop.f32.mrf.mxu0
        %v2628 = vadd.f32 0.0, %v2627
        %v2629 = vpop.f32.mrf.mxu0
        %v2630 = vadd.f32 0.0, %v2629
        %2631 = vmatmul.bf16.gmra.mxu0 %v817
        %v2632 = vpop.f32.mrf.mxu0
        %v2633 = vadd.f32 0.0, %v2632
        %v2634 = vpop.f32.mrf.mxu0
        %v2635 = vadd.f32 0.0, %v2634
        %2636 = vmatmul.bf16.gmra.mxu0 %v820
        %v2637 = vpop.f32.mrf.mxu0
        %v2638 = vadd.f32 0.0, %v2637
        %v2639 = vpop.f32.mrf.mxu0
        %v2640 = vadd.f32 0.0, %v2639
        %2641 = vmatmul.bf16.gmra.mxu0 %v823
        %v2642 = vpop.f32.mrf.mxu0
        %v2643 = vadd.f32 0.0, %v2642
        %v2644 = vpop.f32.mrf.mxu0
        %v2645 = vadd.f32 0.0, %v2644
        %2646 = vmatmul.bf16.gmra.mxu0 %v826
        %v2647 = vpop.f32.mrf.mxu0
        %v2648 = vadd.f32 0.0, %v2647
        %v2649 = vpop.f32.mrf.mxu0
        %v2650 = vadd.f32 0.0, %v2649
        %2651 = vmatmul.bf16.gmra.mxu0 %v829
        %v2652 = vpop.f32.mrf.mxu0
        %v2653 = vadd.f32 0.0, %v2652
        %v2654 = vpop.f32.mrf.mxu0
        %v2655 = vadd.f32 0.0, %v2654
        %2656 = vmatmul.bf16.gmra.mxu0 %v832
        %v2657 = vpop.f32.mrf.mxu0
        %v2658 = vadd.f32 0.0, %v2657
        %v2659 = vpop.f32.mrf.mxu0
        %v2660 = vadd.f32 0.0, %v2659
        %2661 = vmatmul.bf16.gmra.mxu0 %v835
        %v2662 = vpop.f32.mrf.mxu0
        %v2663 = vadd.f32 0.0, %v2662
        %v2664 = vpop.f32.mrf.mxu0
        %v2665 = vadd.f32 0.0, %v2664
        %2666 = vmatmul.bf16.gmra.mxu0 %v838
        %v2667 = vpop.f32.mrf.mxu0
        %v2668 = vadd.f32 0.0, %v2667
        %v2669 = vpop.f32.mrf.mxu0
        %v2670 = vadd.f32 0.0, %v2669
        %2671 = vmatmul.bf16.gmra.mxu0 %v841
        %v2672 = vpop.f32.mrf.mxu0
        %v2673 = vadd.f32 0.0, %v2672
        %v2674 = vpop.f32.mrf.mxu0
        %v2675 = vadd.f32 0.0, %v2674
        %2676 = vmatmul.bf16.gmra.mxu0 %v844
        %v2677 = vpop.f32.mrf.mxu0
        %v2678 = vadd.f32 0.0, %v2677
        %v2679 = vpop.f32.mrf.mxu0
        %v2680 = vadd.f32 0.0, %v2679
        %2681 = vmatmul.bf16.gmra.mxu0 %v847
        %v2682 = vpop.f32.mrf.mxu0
        %v2683 = vadd.f32 0.0, %v2682
        %v2684 = vpop.f32.mrf.mxu0
        %v2685 = vadd.f32 0.0, %v2684
        %2686 = vmatmul.bf16.gmra.mxu0 %v850
        %v2687 = vpop.f32.mrf.mxu0
        %v2688 = vadd.f32 0.0, %v2687
        %v2689 = vpop.f32.mrf.mxu0
        %v2690 = vadd.f32 0.0, %v2689
        %2691 = vmatmul.bf16.gmra.mxu0 %v853
        %v2692 = vpop.f32.mrf.mxu0
        %v2693 = vadd.f32 0.0, %v2692
        %v2694 = vpop.f32.mrf.mxu0
        %v2695 = vadd.f32 0.0, %v2694
        %2696 = vmatmul.bf16.gmra.mxu0 %v856
        %v2697 = vpop.f32.mrf.mxu0
        %v2698 = vadd.f32 0.0, %v2697
        %v2699 = vpop.f32.mrf.mxu0
        %v2700 = vadd.f32 0.0, %v2699
        %2701 = vmatmul.bf16.gmra.mxu0 %v859
        %v2702 = vpop.f32.mrf.mxu0
        %v2703 = vadd.f32 0.0, %v2702
        %v2704 = vpop.f32.mrf.mxu0
        %v2705 = vadd.f32 0.0, %v2704
        %2706 = vmatmul.bf16.gmra.mxu0 %v862
        %v2707 = vpop.f32.mrf.mxu0
        %v2708 = vadd.f32 0.0, %v2707
        %v2709 = vpop.f32.mrf.mxu0
        %v2710 = vadd.f32 0.0, %v2709
        %2711 = vmatmul.bf16.gmra.mxu0 %v865
        %v2712 = vpop.f32.mrf.mxu0
        %v2713 = vadd.f32 0.0, %v2712
        %v2714 = vpop.f32.mrf.mxu0
        %v2715 = vadd.f32 0.0, %v2714
        %2716 = vmatmul.bf16.gmra.mxu0 %v868
        %v2717 = vpop.f32.mrf.mxu0
        %v2718 = vadd.f32 0.0, %v2717
        %v2719 = vpop.f32.mrf.mxu0
        %v2720 = vadd.f32 0.0, %v2719
        %2721 = vmatmul.bf16.gmra.mxu0 %v871
        %v2722 = vpop.f32.mrf.mxu0
        %v2723 = vadd.f32 0.0, %v2722
        %v2724 = vpop.f32.mrf.mxu0
        %v2725 = vadd.f32 0.0, %v2724
        %2726 = vmatmul.bf16.gmra.mxu0 %v2604
        %v2727 = vpop.f32.mrf.mxu0
        %v2728 = vadd.f32 0.0, %v2727
        %v2729 = vpop.f32.mrf.mxu0
        %v2730 = vadd.f32 0.0, %v2729
        %2731 = vmatmul.bf16.gmra.mxu0 %v2607
        %v2732 = vpop.f32.mrf.mxu0
        %v2733 = vadd.f32 0.0, %v2732
        %v2734 = vpop.f32.mrf.mxu0
        %v2735 = vadd.f32 0.0, %v2734
        %2736 = vmatmul.bf16.gmra.mxu0 %v2610
        %v2737 = vpop.f32.mrf.mxu0
        %v2738 = vadd.f32 0.0, %v2737
        %v2739 = vpop.f32.mrf.mxu0
        %v2740 = vadd.f32 0.0, %v2739
        %2741 = vmatmul.bf16.gmra.mxu0 %v2613
        %v2742 = vpop.f32.mrf.mxu0
        %v2743 = vadd.f32 0.0, %v2742
        %v2744 = vpop.f32.mrf.mxu0
        %v2745 = vadd.f32 0.0, %v2744
        %2746 = vdwg.mxu0
        %v2747 = vadd.f32 %v2524, %v2628
        %v2748 = vadd.f32 %v2525, %v2630
        %v2749 = vadd.f32 %v2526, %v2633
        %v2750 = vadd.f32 %v2527, %v2635
        %v2751 = vadd.f32 %v2528, %v2638
        %v2752 = vadd.f32 %v2529, %v2640
        %v2753 = vadd.f32 %v2530, %v2643
        %v2754 = vadd.f32 %v2531, %v2645
        %v2755 = vadd.f32 %v2532, %v2648
        %v2756 = vadd.f32 %v2533, %v2650
        %v2757 = vadd.f32 %v2534, %v2653
        %v2758 = vadd.f32 %v2535, %v2655
        %v2759 = vadd.f32 %v2536, %v2658
        %v2760 = vadd.f32 %v2537, %v2660
        %v2761 = vadd.f32 %v2538, %v2663
        %v2762 = vadd.f32 %v2539, %v2665
        %v2763 = vadd.f32 %v2540, %v2668
        %v2764 = vadd.f32 %v2541, %v2670
        %v2765 = vadd.f32 %v2542, %v2673
        %v2766 = vadd.f32 %v2543, %v2675
        %v2767 = vadd.f32 %v2544, %v2678
        %v2768 = vadd.f32 %v2545, %v2680
        %v2769 = vadd.f32 %v2546, %v2683
        %v2770 = vadd.f32 %v2547, %v2685
        %v2771 = vadd.f32 %v2548, %v2688
        %v2772 = vadd.f32 %v2549, %v2690
        %v2773 = vadd.f32 %v2550, %v2693
        %v2774 = vadd.f32 %v2551, %v2695
        %v2775 = vadd.f32 %v2552, %v2698
        %v2776 = vadd.f32 %v2553, %v2700
        %v2777 = vadd.f32 %v2554, %v2703
        %v2778 = vadd.f32 %v2555, %v2705
        %v2779 = vadd.f32 %v2556, %v2708
        %v2780 = vadd.f32 %v2557, %v2710
        %v2781 = vadd.f32 %v2558, %v2713
        %v2782 = vadd.f32 %v2559, %v2715
        %v2783 = vadd.f32 %v2560, %v2718
        %v2784 = vadd.f32 %v2561, %v2720
        %v2785 = vadd.f32 %v2562, %v2723
        %v2786 = vadd.f32 %v2563, %v2725
        %v2787 = vadd.f32 %v2564, %v2728
        %v2788 = vadd.f32 %v2565, %v2730
        %v2789 = vadd.f32 %v2566, %v2733
        %v2790 = vadd.f32 %v2567, %v2735
        %v2791 = vadd.f32 %v2568, %v2738
        %v2792 = vadd.f32 %v2569, %v2740
        %v2793 = vadd.f32 %v2570, %v2743
        %v2794 = vadd.f32 %v2571, %v2745
        %s2795 = scalar_lea.vmem %s1, 32
        %v2796 = vld [vmem:[%s2795] sm:$0xf]
        %v2797 = vrot.slane %v2380, 1
        %v2798 = vsel %vm1058, %v1104, %v2797
        %v2799 = vrot.slane %v2381, 1
        %v2800 = vsel %vm1058, %v2797, %v2799
        %v2801 = vrot.slane %v2382, 1
        %v2802 = vsel %vm1058, %v2799, %v2801
        %v2803 = vrot.slane %v2576, 1
        %v2804 = vsel %vm1058, %v2801, %v2803
        %v2806 = vsel %vm372, %v2798, 0
        %v2809 = vsel %vm372, %v2800, 0
        %v2812 = vsel %vm372, %v2802, 0
        %v2815 = vsel %vm372, %v2804, 0
        %v2818 = vsel %vm445, %v2796, 0
        %2820 = vmatpush.bf16.msra.mxu0 0
        %2821 = vmatpush.bf16.msra.mxu0 0
        %2822 = vmatpush.bf16.msra.mxu0 0
        %2823 = vmatpush.bf16.msra.mxu0 0
        %2824 = vmatpush.bf16.msra.mxu0 0
        %2825 = vmatpush.bf16.msra.mxu0 0
        %2826 = vmatpush.bf16.msra.mxu0 0
        %2827 = vmatpush.bf16.msra.mxu0 %v2818
        %2828 = vmatmul.bf16.gmra.mxu0 %v1118
        %v2829 = vpop.f32.mrf.mxu0
        %v2830 = vadd.f32 0.0, %v2829
        %v2831 = vpop.f32.mrf.mxu0
        %v2832 = vadd.f32 0.0, %v2831
        %2833 = vmatmul.bf16.gmra.mxu0 %v1121
        %v2834 = vpop.f32.mrf.mxu0
        %v2835 = vadd.f32 0.0, %v2834
        %v2836 = vpop.f32.mrf.mxu0
        %v2837 = vadd.f32 0.0, %v2836
        %2838 = vmatmul.bf16.gmra.mxu0 %v1124
        %v2839 = vpop.f32.mrf.mxu0
        %v2840 = vadd.f32 0.0, %v2839
        %v2841 = vpop.f32.mrf.mxu0
        %v2842 = vadd.f32 0.0, %v2841
        %2843 = vmatmul.bf16.gmra.mxu0 %v1127
        %v2844 = vpop.f32.mrf.mxu0
        %v2845 = vadd.f32 0.0, %v2844
        %v2846 = vpop.f32.mrf.mxu0
        %v2847 = vadd.f32 0.0, %v2846
        %2848 = vmatmul.bf16.gmra.mxu0 %v1130
        %v2849 = vpop.f32.mrf.mxu0
        %v2850 = vadd.f32 0.0, %v2849
        %v2851 = vpop.f32.mrf.mxu0
        %v2852 = vadd.f32 0.0, %v2851
        %2853 = vmatmul.bf16.gmra.mxu0 %v1133
        %v2854 = vpop.f32.mrf.mxu0
        %v2855 = vadd.f32 0.0, %v2854
        %v2856 = vpop.f32.mrf.mxu0
        %v2857 = vadd.f32 0.0, %v2856
        %2858 = vmatmul.bf16.gmra.mxu0 %v1136
        %v2859 = vpop.f32.mrf.mxu0
        %v2860 = vadd.f32 0.0, %v2859
        %v2861 = vpop.f32.mrf.mxu0
        %v2862 = vadd.f32 0.0, %v2861
        %2863 = vmatmul.bf16.gmra.mxu0 %v1139
        %v2864 = vpop.f32.mrf.mxu0
        %v2865 = vadd.f32 0.0, %v2864
        %v2866 = vpop.f32.mrf.mxu0
        %v2867 = vadd.f32 0.0, %v2866
        %2868 = vmatmul.bf16.gmra.mxu0 %v1142
        %v2869 = vpop.f32.mrf.mxu0
        %v2870 = vadd.f32 0.0, %v2869
        %v2871 = vpop.f32.mrf.mxu0
        %v2872 = vadd.f32 0.0, %v2871
        %2873 = vmatmul.bf16.gmra.mxu0 %v1145
        %v2874 = vpop.f32.mrf.mxu0
        %v2875 = vadd.f32 0.0, %v2874
        %v2876 = vpop.f32.mrf.mxu0
        %v2877 = vadd.f32 0.0, %v2876
        %2878 = vmatmul.bf16.gmra.mxu0 %v1148
        %v2879 = vpop.f32.mrf.mxu0
        %v2880 = vadd.f32 0.0, %v2879
        %v2881 = vpop.f32.mrf.mxu0
        %v2882 = vadd.f32 0.0, %v2881
        %2883 = vmatmul.bf16.gmra.mxu0 %v1151
        %v2884 = vpop.f32.mrf.mxu0
        %v2885 = vadd.f32 0.0, %v2884
        %v2886 = vpop.f32.mrf.mxu0
        %v2887 = vadd.f32 0.0, %v2886
        %2888 = vmatmul.bf16.gmra.mxu0 %v1154
        %v2889 = vpop.f32.mrf.mxu0
        %v2890 = vadd.f32 0.0, %v2889
        %v2891 = vpop.f32.mrf.mxu0
        %v2892 = vadd.f32 0.0, %v2891
        %2893 = vmatmul.bf16.gmra.mxu0 %v1157
        %v2894 = vpop.f32.mrf.mxu0
        %v2895 = vadd.f32 0.0, %v2894
        %v2896 = vpop.f32.mrf.mxu0
        %v2897 = vadd.f32 0.0, %v2896
        %2898 = vmatmul.bf16.gmra.mxu0 %v1160
        %v2899 = vpop.f32.mrf.mxu0
        %v2900 = vadd.f32 0.0, %v2899
        %v2901 = vpop.f32.mrf.mxu0
        %v2902 = vadd.f32 0.0, %v2901
        %2903 = vmatmul.bf16.gmra.mxu0 %v1163
        %v2904 = vpop.f32.mrf.mxu0
        %v2905 = vadd.f32 0.0, %v2904
        %v2906 = vpop.f32.mrf.mxu0
        %v2907 = vadd.f32 0.0, %v2906
        %2908 = vmatmul.bf16.gmra.mxu0 %v1166
        %v2909 = vpop.f32.mrf.mxu0
        %v2910 = vadd.f32 0.0, %v2909
        %v2911 = vpop.f32.mrf.mxu0
        %v2912 = vadd.f32 0.0, %v2911
        %2913 = vmatmul.bf16.gmra.mxu0 %v1169
        %v2914 = vpop.f32.mrf.mxu0
        %v2915 = vadd.f32 0.0, %v2914
        %v2916 = vpop.f32.mrf.mxu0
        %v2917 = vadd.f32 0.0, %v2916
        %2918 = vmatmul.bf16.gmra.mxu0 %v1172
        %v2919 = vpop.f32.mrf.mxu0
        %v2920 = vadd.f32 0.0, %v2919
        %v2921 = vpop.f32.mrf.mxu0
        %v2922 = vadd.f32 0.0, %v2921
        %2923 = vmatmul.bf16.gmra.mxu0 %v1175
        %v2924 = vpop.f32.mrf.mxu0
        %v2925 = vadd.f32 0.0, %v2924
        %v2926 = vpop.f32.mrf.mxu0
        %v2927 = vadd.f32 0.0, %v2926
        %2928 = vmatmul.bf16.gmra.mxu0 %v2806
        %v2929 = vpop.f32.mrf.mxu0
        %v2930 = vadd.f32 0.0, %v2929
        %v2931 = vpop.f32.mrf.mxu0
        %v2932 = vadd.f32 0.0, %v2931
        %2933 = vmatmul.bf16.gmra.mxu0 %v2809
        %v2934 = vpop.f32.mrf.mxu0
        %v2935 = vadd.f32 0.0, %v2934
        %v2936 = vpop.f32.mrf.mxu0
        %v2937 = vadd.f32 0.0, %v2936
        %2938 = vmatmul.bf16.gmra.mxu0 %v2812
        %v2939 = vpop.f32.mrf.mxu0
        %v2940 = vadd.f32 0.0, %v2939
        %v2941 = vpop.f32.mrf.mxu0
        %v2942 = vadd.f32 0.0, %v2941
        %2943 = vmatmul.bf16.gmra.mxu0 %v2815
        %v2944 = vpop.f32.mrf.mxu0
        %v2945 = vadd.f32 0.0, %v2944
        %v2946 = vpop.f32.mrf.mxu0
        %v2947 = vadd.f32 0.0, %v2946
        %2948 = vdwg.mxu0
        %v2949 = vadd.f32 %v2747, %v2830
        %v2950 = vadd.f32 %v2748, %v2832
        %v2951 = vadd.f32 %v2749, %v2835
        %v2952 = vadd.f32 %v2750, %v2837
        %v2953 = vadd.f32 %v2751, %v2840
        %v2954 = vadd.f32 %v2752, %v2842
        %v2955 = vadd.f32 %v2753, %v2845
        %v2956 = vadd.f32 %v2754, %v2847
        %v2957 = vadd.f32 %v2755, %v2850
        %v2958 = vadd.f32 %v2756, %v2852
        %v2959 = vadd.f32 %v2757, %v2855
        %v2960 = vadd.f32 %v2758, %v2857
        %v2961 = vadd.f32 %v2759, %v2860
        %v2962 = vadd.f32 %v2760, %v2862
        %v2963 = vadd.f32 %v2761, %v2865
        %v2964 = vadd.f32 %v2762, %v2867
        %v2965 = vadd.f32 %v2763, %v2870
        %v2966 = vadd.f32 %v2764, %v2872
        %v2967 = vadd.f32 %v2765, %v2875
        %v2968 = vadd.f32 %v2766, %v2877
        %v2969 = vadd.f32 %v2767, %v2880
        %v2970 = vadd.f32 %v2768, %v2882
        %v2971 = vadd.f32 %v2769, %v2885
        %v2972 = vadd.f32 %v2770, %v2887
        %v2973 = vadd.f32 %v2771, %v2890
        %v2974 = vadd.f32 %v2772, %v2892
        %v2975 = vadd.f32 %v2773, %v2895
        %v2976 = vadd.f32 %v2774, %v2897
        %v2977 = vadd.f32 %v2775, %v2900
        %v2978 = vadd.f32 %v2776, %v2902
        %v2979 = vadd.f32 %v2777, %v2905
        %v2980 = vadd.f32 %v2778, %v2907
        %v2981 = vadd.f32 %v2779, %v2910
        %v2982 = vadd.f32 %v2780, %v2912
        %v2983 = vadd.f32 %v2781, %v2915
        %v2984 = vadd.f32 %v2782, %v2917
        %v2985 = vadd.f32 %v2783, %v2920
        %v2986 = vadd.f32 %v2784, %v2922
        %v2987 = vadd.f32 %v2785, %v2925
        %v2988 = vadd.f32 %v2786, %v2927
        %v2989 = vadd.f32 %v2787, %v2930
        %v2990 = vadd.f32 %v2788, %v2932
        %v2991 = vadd.f32 %v2789, %v2935
        %v2992 = vadd.f32 %v2790, %v2937
        %v2993 = vadd.f32 %v2791, %v2940
        %v2994 = vadd.f32 %v2792, %v2942
        %v2995 = vadd.f32 %v2793, %v2945
        %v2996 = vadd.f32 %v2794, %v2947
        %2997 = vst [vmem:[%s182] sm:$0xff] %v2949
        %2998 = vst [vmem:[%s182 + $0x8] sm:$0xff] %v2950
        %2999 = vst [vmem:[%s182 + $0x10] sm:$0xff] %v2951
        %3000 = vst [vmem:[%s182 + $0x18] sm:$0xff] %v2952
        %3001 = vst [vmem:[%s182 + $0x20] sm:$0xff] %v2953
        %3002 = vst [vmem:[%s182 + $0x28] sm:$0xff] %v2954
        %3003 = vst [vmem:[%s182 + $0x30] sm:$0xff] %v2955
        %3004 = vst [vmem:[%s182 + $0x38] sm:$0xff] %v2956
        %3005 = vst [vmem:[%s182 + $0x40] sm:$0xff] %v2957
        %3006 = vst [vmem:[%s182 + $0x48] sm:$0xff] %v2958
        %3007 = vst [vmem:[%s182 + $0x50] sm:$0xff] %v2959
        %3008 = vst [vmem:[%s182 + $0x58] sm:$0xff] %v2960
        %3009 = vst [vmem:[%s182 + $0x60] sm:$0xff] %v2961
        %3010 = vst [vmem:[%s182 + $0x68] sm:$0xff] %v2962
        %3011 = vst [vmem:[%s182 + $0x70] sm:$0xff] %v2963
        %3012 = vst [vmem:[%s182 + $0x78] sm:$0xff] %v2964
        %3013 = vst [vmem:[%s182 + $0x80] sm:$0xff] %v2965
        %3014 = vst [vmem:[%s182 + $0x88] sm:$0xff] %v2966
        %3015 = vst [vmem:[%s182 + $0x90] sm:$0xff] %v2967
        %3016 = vst [vmem:[%s182 + $0x98] sm:$0xff] %v2968
        %3017 = vst [vmem:[%s182 + $0xa0] sm:$0xff] %v2969
        %3018 = vst [vmem:[%s182 + $0xa8] sm:$0xff] %v2970
        %3019 = vst [vmem:[%s182 + $0xb0] sm:$0xff] %v2971
        %3020 = vst [vmem:[%s182 + $0xb8] sm:$0xff] %v2972
        %3021 = vst [vmem:[%s182 + $0xc0] sm:$0xff] %v2973
        %3022 = vst [vmem:[%s182 + $0xc8] sm:$0xff] %v2974
        %3023 = vst [vmem:[%s182 + $0xd0] sm:$0xff] %v2975
        %3024 = vst [vmem:[%s182 + $0xd8] sm:$0xff] %v2976
        %3025 = vst [vmem:[%s182 + $0xe0] sm:$0xff] %v2977
        %3026 = vst [vmem:[%s182 + $0xe8] sm:$0xff] %v2978
        %3027 = vst [vmem:[%s182 + $0xf0] sm:$0xff] %v2979
        %3028 = vst [vmem:[%s182 + $0xf8] sm:$0xff] %v2980
        %3029 = vst [vmem:[%s182 + $0x100] sm:$0xff] %v2981
        %3030 = vst [vmem:[%s182 + $0x108] sm:$0xff] %v2982
        %3031 = vst [vmem:[%s182 + $0x110] sm:$0xff] %v2983
        %3032 = vst [vmem:[%s182 + $0x118] sm:$0xff] %v2984
        %3033 = vst [vmem:[%s182 + $0x120] sm:$0xff] %v2985
        %3034 = vst [vmem:[%s182 + $0x128] sm:$0xff] %v2986
        %3035 = vst [vmem:[%s182 + $0x130] sm:$0xff] %v2987
        %3036 = vst [vmem:[%s182 + $0x138] sm:$0xff] %v2988
        %3037 = vst [vmem:[%s182 + $0x140] sm:$0xff] %v2989
        %3038 = vst [vmem:[%s182 + $0x148] sm:$0xff] %v2990
        %3039 = vst [vmem:[%s182 + $0x150] sm:$0xff] %v2991
        %3040 = vst [vmem:[%s182 + $0x158] sm:$0xff] %v2992
        %3041 = vst [vmem:[%s182 + $0x160] sm:$0xff] %v2993
        %3042 = vst [vmem:[%s182 + $0x168] sm:$0xff] %v2994
        %3043 = vst [vmem:[%s182 + $0x170] sm:$0xff] %v2995
        %3044 = vst [vmem:[%s182 + $0x178] sm:$0xff] %v2996
        %s3045 = sand.u32 %s109, 1
        %s3046 = scalar_lea.sflag [#allocation3], %s3045
        %s3047 = sand.u32 %s109, 1
        %s3048 = smul.addr %s3047, 384
        %s3049 = scalar_lea.vmem [#allocation2], %s3048
        // Predicated region
        $region33: #{tpu_custom_call.1} parent=31 // pred_check
          %p3050 = pneg %p119
        $region34: #{tpu_custom_call.1} parent=31 // pred_check_branch
          %3052 = sbr.rel (%p3050) target = $region36
        $region35: #{tpu_custom_call.1} parent=31 // pred_region
          %s3053 = sadd.s32 %s21, %s22
          %3055 = vsyncadd %s3046, 0
          %s3056 = smul.addr %s3053, 48
          %s3057 = smul.addr %s3056, 8
          %s3058 = scalar_lea.hbm %s3, %s3057
          %s3059 = sshll.u32 %s3049, 4
          %s3060 = int_to_ptr.vmem [resolvable:$true] %s3059
          %s3061 = sshll.u32 %s3058, 4
          %s3062 = int_to_ptr.hbm [resolvable:$true] %s3061
          %3067 = dma.vmem_to_hbm [thread:$0]  %s3060, 6144, %s3062, %s3046, 128, 128, 8
        $region36: #{tpu_custom_call.1} parent=31 // pred_fallthru
          _
      $region32: #{tpu_custom_call.1} parent=5 // pred_fallthru
        _
      %p3068 = scmp.le.s32.totalorder 2, %s12
      // Predicated region
      $region37: #{tpu_custom_call.1} parent=5 // pred_check
        %p3069 = pneg %p3068
      $region38: #{tpu_custom_call.1} parent=5 // pred_check_branch
        %3071 = sbr.rel (%p3069) target = $region40
      $region39: #{tpu_custom_call.1} parent=5 // pred_region
        %s3072 = ssub.s32 %s12, 2
        // Predicated region
        $region41: #{tpu_custom_call.1} parent=39 // pred_check
          %p3073 = pneg %p125
        $region42: #{tpu_custom_call.1} parent=39 // pred_check_branch
          %3075 = sbr.rel (%p3073) target = $region44
        $region43: #{tpu_custom_call.1} parent=39 // pred_region
          %s3076 = sand.u32 %s110, 1
          %s3077 = scalar_lea.sflag [#allocation3], %s3076
          %s3078 = sand.u32 %s110, 1
          %s3079 = smul.addr %s3078, 384
          %s3080 = scalar_lea.vmem [#allocation2], %s3079
          %3082 = dma.done %s3077, 6144
        $region44: #{tpu_custom_call.1} parent=39 // pred_fallthru
          _
      $region40: #{tpu_custom_call.1} parent=5 // pred_fallthru
        _
    $region6: #{tpu_custom_call.1} parent=1 // loop_footer
      %s16 = sadd.s32 1, %s12
    $region7: #{tpu_custom_call.1} parent=1 // loop_footer_branch
      %11 = sbr.rel target = $region3
    $region8: #{tpu_custom_call.1} parent=1 // loop_exit
      _
    %3083 = vsyncpa [#allocation3], 1
    %s3084 = scalar_lea.sflag [#allocation3], 1
    %3085 = vsyncpa %s3084, 1

</llo_original>
